<compile_context>
chip_gen: v5e
topology: v5e:2x2
jax: 0.10.0
libtpu: 0.0.40
codegen_flags: <defaults>
</compile_context>

<pallas_src>
import functools
import math

import jax
import jax.numpy as jnp
from jax import lax
from jax.experimental import pallas as pl
from jax.experimental.pallas import tpu as pltpu

LN_EPS = 1e-5
NEG_INF = -1e30
_GELU_C = math.sqrt(2.0 / math.pi)

# vec-slab row layout (per layer); every row is zero-padded to LMAX lanes.
(_ROW_LN1G, _ROW_LN1B, _ROW_BO, _ROW_BR, _ROW_LN2G, _ROW_LN2B,
 _ROW_BB12, _ROW_BAD1, _ROW_BAD2) = range(9)
_N_VEC_ROWS = 9


# ----------------------------- in-kernel math -----------------------------

def _gelu(x):
    # tanh-form GELU: tanh runs on the EUP slot (off the VALU critical path).
    # TODO(synk): torch.nn.GELU() default is exact-erf; tanh form differs by
    #             <~1e-3, accepted per performance guidance (eval only).
    return 0.5 * x * (1.0 + jnp.tanh(_GELU_C * (x + 0.044715 * x * x * x)))


def _layernorm(x, g, b):
    mu = jnp.mean(x, axis=-1, keepdims=True)
    var = jnp.mean((x - mu) ** 2, axis=-1, keepdims=True)
    return (x - mu) * lax.rsqrt(var + LN_EPS) * g + b


def _bf16(x):
    return x.astype(jnp.bfloat16)


# ---------------------- fused whole-network kernel -------------------------

def _vit_kernel(patches_ref, pw_ref, pb_ref, wd_ref, woad_ref, bexp_ref,
                vec_ref, xo_ref, wout_ref,
                *, heads, dim_head, num_expert, top_k, e_pad, mlp_dim):
    """One grid step = one transformer layer for one batch block.

    grid = (batch_blocks, depth); the depth axis ("arbitrary", innermost)
    carries the residual stream in the *resident* output block `xo_ref`
    (index map constant in the layer index), so x never round-trips HBM
    between layers and only one full-block store happens per layer.
    Patch embedding runs at layer 0.
    """
    layer = pl.program_id(1)
    bt, n_tok, dim = xo_ref.shape
    hdh = heads * dim_head
    n_exp = num_expert
    mdim = mlp_dim
    t = bt * n_tok

    def vrow(r, w):
        # static Ref slice -> (1, w) f32 bias / LayerNorm row (no slab copy)
        return vec_ref[0, r:r + 1, :w]

    # ---- patch embedding (layer 0 only): x <- patches @ Wp + bp ----
    @pl.when(layer == 0)
    def _():
        k_in = pw_ref.shape[0]
        p = patches_ref[...].reshape(t, k_in)           # bf16 from the wrapper
        x0 = jnp.dot(p, pw_ref[...], preferred_element_type=jnp.float32)
        xo_ref[...] = (x0 + pb_ref[...]).reshape(bt, n_tok, dim)

    x = xo_ref[...].reshape(t, dim)        # residual stream (resident block)

    # ---- PreNorm multi-head self-attention + residual ----
    xn = _layernorm(x, vrow(_ROW_LN1G, dim), vrow(_ROW_LN1B, dim))
    # fused QKV projection: one lane-dense (D, 3*H*Dh) matmul (Ref-sliced W)
    qkv = jnp.dot(_bf16(xn), wd_ref[0, :, 0:3 * hdh],
                  preferred_element_type=jnp.float32)
    qkv = qkv.reshape(bt, n_tok, 3 * hdh)
    scale = dim_head ** -0.5
    attn = jnp.zeros((t, dim), jnp.float32)
    # Static unroll over heads only (small architecture constant); batch is
    # handled by single-batch-dim einsums.  Each head is folded into the
    # output projection immediately (attn += o_h @ Wo_h), bounding live ranges.
    # TODO(synk): per-head lane offsets (h*Dh) are not 128-aligned; pad Dh in
    #             the slab if profiling shows XLU shuffle overhead here.
    for h in range(heads):
        c0 = h * dim_head
        q = qkv[:, :, c0:c0 + dim_head] * scale
        k = qkv[:, :, hdh + c0:hdh + c0 + dim_head]
        v = qkv[:, :, 2 * hdh + c0:2 * hdh + c0 + dim_head]
        s = jnp.einsum('bqd,bkd->bqk', _bf16(q), _bf16(k),
                       preferred_element_type=jnp.float32)       # (bt, N, N)
        s = s - jnp.max(s, axis=-1, keepdims=True)
        p = jnp.exp(s)
        p = p * pl.reciprocal(jnp.sum(p, axis=-1, keepdims=True), approx=True)
        o = jnp.einsum('bqk,bkd->bqd', _bf16(p), _bf16(v),
                       preferred_element_type=jnp.float32)       # (bt, N, Dh)
        attn = attn + jnp.dot(_bf16(o.reshape(t, dim_head)),
                              woad_ref[0, c0:c0 + dim_head, :],
                              preferred_element_type=jnp.float32)
    x = x + attn + vrow(_ROW_BO, dim)

    # ---- router: Linear (E padded to 128 lanes) -> KeepTopK -> Softmax ----
    off = 3 * hdh
    logits = jnp.dot(_bf16(x), wd_ref[0, :, off:off + e_pad],
                     preferred_element_type=jnp.float32) + vrow(_ROW_BR, e_pad)
    # padded columns have zero weight + -1e30 bias -> never in the top-k and
    # contribute exactly 0 to the softmax, so the real-expert output is exact.
    if 0 < top_k < num_expert:
        tmp = logits
        thr = jnp.max(tmp, axis=-1, keepdims=True)
        for _ in range(top_k - 1):
            tmp = jnp.where(tmp >= thr, NEG_INF, tmp)
            thr = jnp.max(tmp, axis=-1, keepdims=True)
        masked = jnp.where(logits >= thr, logits, NEG_INF)
    else:
        masked = logits
    m = jnp.max(masked, axis=-1, keepdims=True)
    ex = jnp.exp(masked - m)
    weights = ex / jnp.sum(ex, axis=-1, keepdims=True)   # exact: returned
    wout_ref[0] = weights[:, :n_exp].reshape(bt, n_tok, n_exp)

    # ---- FiLM MoE feed-forward ----
    off += e_pad
    yt = _layernorm(x, vrow(_ROW_LN2G, dim), vrow(_ROW_LN2B, dim))
    # fused gated base net: one (D, 2D) matmul, slice h1/h2 from the result
    h12 = jnp.dot(_bf16(yt), wd_ref[0, :, off:off + 2 * dim],
                  preferred_element_type=jnp.float32) + vrow(_ROW_BB12, 2 * dim)
    y_temp = _gelu(h12[:, :dim]) * h12[:, dim:2 * dim]
    off += 2 * dim
    # all 2*E FiLM expert linears as one (D, 2*E*D) matmul (no bias here)
    pa = jnp.dot(_bf16(y_temp), wd_ref[0, :, off:off + 2 * n_exp * dim],
                 preferred_element_type=jnp.float32)             # (T, 2*E*D)
    # expert biases folded into one tiny MXU matmul after the mix:
    #   bmix = weights @ [bp ; ba]   (padded expert rows are exactly zero)
    bmix = jnp.dot(_bf16(weights), bexp_ref[0, :, :],
                   preferred_element_type=jnp.float32)           # (T, 2*D)
    acc_p = bmix[:, :dim]
    acc_a = bmix[:, dim:2 * dim]
    for e in range(n_exp):
        w_e = weights[:, e:e + 1]
        acc_p = acc_p + w_e * pa[:, e * dim:(e + 1) * dim]
        acc_a = acc_a + w_e * pa[:, (n_exp + e) * dim:(n_exp + e + 1) * dim]
    y = acc_p * y_temp + acc_a   # == sum_e w_e * (prod_e(y_t) * y_t + add_e(y_t))

    # ---- adaptor MLP + residual ----
    off += 2 * n_exp * dim
    a1 = _gelu(jnp.dot(_bf16(y), wd_ref[0, :, off:off + mdim],
                       preferred_element_type=jnp.float32) + vrow(_ROW_BAD1, mdim))
    y2 = jnp.dot(_bf16(a1), woad_ref[0, hdh:hdh + mdim, :],
                 preferred_element_type=jnp.float32) + vrow(_ROW_BAD2, dim)
    x = x + y2

    # carry the residual stream in the resident output block; HBM writeback
    # happens only once per batch block (when the block index changes).
    xo_ref[...] = x.reshape(bt, n_tok, dim)


# ----------------------------- parameter packing ----------------------------

def _pack_params(params, *, heads, dim_head, num_expert, e_pad):
    """Pack per-layer params into stacked slabs consumed by the kernel."""
    D = params['patch_w'].shape[1]
    E = num_expert
    hdh = heads * dim_head
    M = params['layers'][0]['wad1'].shape[1]
    lmax = max(D, 2 * D, e_pad, M)

    def row(v):
        v = jnp.asarray(v, jnp.float32).reshape(-1)
        return jnp.pad(v, (0, lmax - v.shape[0]))

    wd_l, woad_l, bexp_l, vec_l = [], [], [], []
    for lp in params['layers']:
        wq = lp['wq'].transpose(1, 0, 2).reshape(D, hdh)
        wk = lp['wk'].transpose(1, 0, 2).reshape(D, hdh)
        wv = lp['wv'].transpose(1, 0, 2).reshape(D, hdh)
        wr = jnp.zeros((D, e_pad), jnp.float32).at[:, :E].set(lp['wr'])
        wb12 = jnp.concatenate([lp['wb1'], lp['wb2']], axis=1)
        wpa = jnp.concatenate(
            [lp['wp'].transpose(1, 0, 2).reshape(D, E * D),
             lp['wa'].transpose(1, 0, 2).reshape(D, E * D)], axis=1)
        wd_l.append(jnp.concatenate([wq, wk, wv, wr, wb12, wpa, lp['wad1']],
                                    axis=1).astype(jnp.bfloat16))
        woad_l.append(jnp.concatenate([lp['wo'].reshape(hdh, D), lp['wad2']],
                                      axis=0).astype(jnp.bfloat16))
        bexp = jnp.zeros((e_pad, 2 * D), jnp.float32)
        bexp = bexp.at[:E, :D].set(lp['bp']).at[:E, D:].set(lp['ba'])
        bexp_l.append(bexp.astype(jnp.bfloat16))
        br = jnp.full((e_pad,), NEG_INF, jnp.float32).at[:E].set(
            lp['br'].reshape(-1))
        vec_l.append(jnp.stack([
            row(lp['ln1g']), row(lp['ln1b']), row(lp['bo']), row(br),
            row(lp['ln2g']), row(lp['ln2b']),
            row(jnp.concatenate([lp['bb1'].reshape(-1),
                                 lp['bb2'].reshape(-1)])),
            row(lp['bad1']), row(lp['bad2'])], axis=0))

    return {
        'pw': params['patch_w'].astype(jnp.bfloat16),   # (K, D)
        'pb': params['patch_b'].astype(jnp.float32),    # (1, D)
        'wd': jnp.stack(wd_l, axis=0),        # (depth, D, W1)          bf16
        'woad': jnp.stack(woad_l, axis=0),    # (depth, H*Dh + M, D)    bf16
        'bexp': jnp.stack(bexp_l, axis=0),    # (depth, e_pad, 2D)      bf16
        'vec': jnp.stack(vec_l, axis=0),      # (depth, 9, LMAX)        f32
    }


def _vmem_limit_bytes(*, bt, n_tok, k_in, dim, hdh, mdim, n_exp, e_pad,
                      w1, n_vec, lmax, heads):
    """Scoped-VMEM budget: double-buffered slabs + IO blocks + live acts."""
    bf16, f32 = 2, 4
    weights = ((dim * w1 + (hdh + mdim) * dim + e_pad * 2 * dim
                + k_in * dim) * bf16 + (n_vec * lmax + dim) * f32)
    io = bt * n_tok * (k_in * bf16 + dim * f32 + n_exp * f32)
    t = bt * n_tok
    acts = (t * (3 * hdh + 2 * e_pad + 8 * dim + 2 * n_exp * dim + mdim) * f32
            + 2 * bt * n_tok * n_tok * f32)
    est = 2 * (weights + io) + 2 * acts
    # TODO(synk): on v7x (64 MiB VMEM) at real ViT dims, split the FiLM-expert
    #             columns into their own streamed ref / use pl.Buffered(1) on
    #             the weight slabs and lower batch_block before raising this.
    return int(min(max(est, 32 * 1024 * 1024), 128 * 1024 * 1024))


# ------------------------------ parameter init ------------------------------

def init_params(key, *, patch_size, channels, embed_dim, depth, heads,
                dim_head, mlp_dim, num_expert):
    D, M, E, H, Dh = embed_dim, mlp_dim, num_expert, heads, dim_head
    K = channels * patch_size * patch_size
    keys = iter(jax.random.split(key, 4096))

    def nrm(shape, scale=0.05):
        return (scale * jax.random.normal(next(keys), shape)).astype(jnp.float32)

    params = {'patch_w': nrm((K, D)), 'patch_b': nrm((1, D)), 'layers': []}
    for _ in range(depth):
        lp = {
            'ln1g': jnp.ones((1, D), jnp.float32),
            'ln1b': jnp.zeros((1, D), jnp.float32),
            'wq': nrm((H, D, Dh)), 'wk': nrm((H, D, Dh)), 'wv': nrm((H, D, Dh)),
            'wo': nrm((H, Dh, D)), 'bo': nrm((1, D)),
            'wr': nrm((D, E)), 'br': nrm((1, E)),
            'ln2g': jnp.ones((1, D), jnp.float32),
            'ln2b': jnp.zeros((1, D), jnp.float32),
            'wb1': nrm((D, D)), 'bb1': nrm((1, D)),
            'wb2': nrm((D, D)), 'bb2': nrm((1, D)),
            'wp': nrm((E, D, D)), 'bp': nrm((E, D)),
            'wa': nrm((E, D, D)), 'ba': nrm((E, D)),
            'wad1': nrm((D, M)), 'bad1': nrm((1, M)),
            'wad2': nrm((M, D)), 'bad2': nrm((1, D)),
        }
        params['layers'].append(lp)
    return params


# ------------------------------- full forward -------------------------------

def vit_moe_film_forward(img, params, *, patch_size, heads, dim_head,
                         num_expert, top_k, batch_block=1, task_idx=0):
    """Eval-mode forward of ViT_MoE_FiLM as one fused pallas_call.

    `batch_block` should be swept upward so bt*N >= ~128 rows (MXU M-dim) once
    VMEM allows, while keeping B//batch_block a multiple of 2 for v7x's two
    TensorCores (the batch grid axis is marked "parallel").
    """
    del task_idx  # unused in the eval forward (matches the PyTorch module)
    B, C, H, W = img.shape
    P = patch_size
    hp, wp = H // P, W // P
    N = hp * wp
    # NCHW -> (B, N, C*P*P) with (c, ph, pw) flattening == Conv2d weight layout
    patches = img.reshape(B, C, hp, P, wp, P).transpose(0, 2, 4, 1, 3, 5)
    patches = patches.reshape(B, N, C * P * P).astype(jnp.bfloat16)

    depth = len(params['layers'])
    D = params['patch_w'].shape[1]
    M = params['layers'][0]['wad1'].shape[1]
    hdh = heads * dim_head
    e_pad = ((num_expert + 127) // 128) * 128       # lane-dense router width
    packed = _pack_params(params, heads=heads, dim_head=dim_head,
                          num_expert=num_expert, e_pad=e_pad)

    K = patches.shape[2]
    w1 = packed['wd'].shape[2]
    assert w1 == 3 * hdh + e_pad + 2 * D + 2 * num_expert * D + M
    n_vec, lmax = packed['vec'].shape[1:]
    bt = batch_block
    assert B % bt == 0

    vmem_limit = _vmem_limit_bytes(bt=bt, n_tok=N, k_in=K, dim=D, hdh=hdh,
                                   mdim=M, n_exp=num_expert, e_pad=e_pad,
                                   w1=w1, n_vec=n_vec, lmax=lmax, heads=heads)

    kernel = functools.partial(_vit_kernel, heads=heads, dim_head=dim_head,
                               num_expert=num_expert, top_k=top_k,
                               e_pad=e_pad, mlp_dim=M)

    x_out, w_out = pl.pallas_call(
        kernel,
        grid=(B // bt, depth),
        in_specs=[
            pl.BlockSpec((bt, N, K), lambda b, l: (b, 0, 0)),        # patches
            pl.BlockSpec((K, D), lambda b, l: (0, 0)),               # patch W
            pl.BlockSpec((1, D), lambda b, l: (0, 0)),               # patch b
            pl.BlockSpec((1, D, w1), lambda b, l: (l, 0, 0)),        # D-slab
            pl.BlockSpec((1, hdh + M, D), lambda b, l: (l, 0, 0)),   # Wo/Wad2
            pl.BlockSpec((1, e_pad, 2 * D), lambda b, l: (l, 0, 0)), # FiLM bias
            pl.BlockSpec((1, n_vec, lmax), lambda b, l: (l, 0, 0)),  # bias/LN
        ],
        out_specs=[
            pl.BlockSpec((bt, N, D), lambda b, l: (b, 0, 0)),        # resident
            pl.BlockSpec((1, bt, N, num_expert), lambda b, l: (l, b, 0, 0)),
        ],
        out_shape=(jax.ShapeDtypeStruct((B, N, D), jnp.float32),
                   jax.ShapeDtypeStruct((depth, B, N, num_expert), jnp.float32)),
        compiler_params=pltpu.CompilerParams(
            dimension_semantics=("parallel", "arbitrary"),
            vmem_limit_bytes=vmem_limit),
    )(patches, packed['pw'], packed['pb'], packed['wd'], packed['woad'],
      packed['bexp'], packed['vec'])

    weights_list = [w_out[i] for i in range(depth)]
    cls_output = None
    l_aux = None
    return x_out, cls_output, weights_list, l_aux


# ----------------------------------- main -----------------------------------

if __name__ == "__main__":
    # small config consistent with the module
    img_size, patch_size, channels = 16, 4, 3
    embed_dim, depth, n_heads, dim_head, mlp_dim = 32, 2, 2, 16, 64
    num_expert, top_k = 4, 2
    batch = 2

    key = jax.random.PRNGKey(0)
    k_img, k_par = jax.random.split(key)
    img = jax.random.normal(k_img, (batch, channels, img_size, img_size),
                            dtype=jnp.float32)

    params = init_params(k_par, patch_size=patch_size, channels=channels,
                         embed_dim=embed_dim, depth=depth, heads=n_heads,
                         dim_head=dim_head, mlp_dim=mlp_dim,
                         num_expert=num_expert)

    x, cls_out, weights_list, l_aux = vit_moe_film_forward(
        img, params, patch_size=patch_size, heads=n_heads, dim_head=dim_head,
        num_expert=num_expert, top_k=top_k, batch_block=1)

    x = jax.block_until_ready(x)
    weights_list = [jax.block_until_ready(w) for w in weights_list]

    n_tokens = (img_size // patch_size) ** 2
    assert x.shape == (batch, n_tokens, embed_dim)
    assert len(weights_list) == depth
    assert all(w.shape == (batch, n_tokens, num_expert) for w in weights_list)
    assert bool(jnp.all(jnp.isfinite(x)))
    for w in weights_list:
        assert bool(jnp.all(jnp.isfinite(w)))
        # router weights are a (top-k masked) exact softmax -> rows sum to ~1
        assert bool(jnp.all(jnp.abs(jnp.sum(w, axis=-1) - 1.0) < 1e-3))

    print("KERNEL_OK")
</pallas_src>

<mosaic_0001>
module attributes {stable_mosaic.version = 11 : i64} {
  func.func @_vit_kernel(%arg0: i32, %arg1: i32, %arg2: memref<1x16x48xbf16, #tpu.memory_space<vmem>>, %arg3: memref<48x32xbf16, #tpu.memory_space<vmem>>, %arg4: memref<1x32xf32, #tpu.memory_space<vmem>>, %arg5: memref<1x32x608xbf16, #tpu.memory_space<vmem>>, %arg6: memref<1x96x32xbf16, #tpu.memory_space<vmem>>, %arg7: memref<1x128x64xbf16, #tpu.memory_space<vmem>>, %arg8: memref<1x9x128xf32, #tpu.memory_space<vmem>>, %arg9: memref<1x16x32xf32, #tpu.memory_space<vmem>>, %arg10: memref<1x1x16x4xf32, #tpu.memory_space<vmem>>) attributes {dimension_semantics = [#tpu.dimension_semantics<parallel>, #tpu.dimension_semantics<arbitrary>], iteration_bounds = array<i64: 2, 2>, scalar_prefetch = 0 : i64, scratch_operands = 0 : i64, tpu.core_type = #tpu.core_type<tc>, window_params = [{transform_indices = @transform_0, window_bounds = array<i64: 1, 16, 48>}, {pipeline_mode = #tpu.pipeline_mode<synchronous>, transform_indices = @transform_1, window_bounds = array<i64: 48, 32>}, {pipeline_mode = #tpu.pipeline_mode<synchronous>, transform_indices = @transform_2, window_bounds = array<i64: 1, 32>}, {transform_indices = @transform_3, window_bounds = array<i64: 1, 32, 608>}, {transform_indices = @transform_4, window_bounds = array<i64: 1, 96, 32>}, {transform_indices = @transform_5, window_bounds = array<i64: 1, 128, 64>}, {transform_indices = @transform_6, window_bounds = array<i64: 1, 9, 128>}, {transform_indices = @transform_7, window_bounds = array<i64: 1, 16, 32>}, {transform_indices = @transform_8, window_bounds = array<i64: 1, 1, 16, 4>}]} {
    %c0_i32 = arith.constant 0 : i32
    %0 = arith.cmpi eq, %arg1, %c0_i32 : i32
    %1 = arith.extui %0 : i1 to i32
    %c0_i32_0 = arith.constant 0 : i32
    %2 = arith.cmpi ne, %1, %c0_i32_0 : i32
    scf.if %2 {
      %c0_93 = arith.constant 0 : index
      %c0_94 = arith.constant 0 : index
      %c0_95 = arith.constant 0 : index
      %260 = vector.load %arg2[%c0_93, %c0_94, %c0_95] : memref<1x16x48xbf16, #tpu.memory_space<vmem>>, vector<1x16x48xbf16>
      %261 = vector.shape_cast %260 : vector<1x16x48xbf16> to vector<16x48xbf16>
      %c0_96 = arith.constant 0 : index
      %c0_97 = arith.constant 0 : index
      %262 = vector.load %arg3[%c0_96, %c0_97] : memref<48x32xbf16, #tpu.memory_space<vmem>>, vector<48x32xbf16>
      %cst_98 = arith.constant dense<0.000000e+00> : vector<16x32xf32>
      %263 = tpu.matmul %261, %262, %cst_98 {dimension_numbers = #tpu.dot_dimension_numbers<[1], [0], [0], [1], [0, 0, 1, 1], [], []>} : vector<16x48xbf16>, vector<48x32xbf16>, vector<16x32xf32> -> vector<16x32xf32>
      %c0_99 = arith.constant 0 : index
      %c0_100 = arith.constant 0 : index
      %264 = vector.load %arg4[%c0_99, %c0_100] : memref<1x32xf32, #tpu.memory_space<vmem>>, vector<1x32xf32>
      %265 = vector.broadcast %264 : vector<1x32xf32> to vector<16x32xf32>
      %266 = arith.addf %263, %265 : vector<16x32xf32>
      %267 = vector.shape_cast %266 : vector<16x32xf32> to vector<1x16x32xf32>
      %c0_101 = arith.constant 0 : index
      %c0_102 = arith.constant 0 : index
      %c0_103 = arith.constant 0 : index
      %268 = vector.load %arg9[%c0_101, %c0_102, %c0_103] : memref<1x16x32xf32, #tpu.memory_space<vmem>>, vector<1x16x32xf32>
      tpu.vector_store %arg9[%c0_101, %c0_102, %c0_103], %267 {strides = array<i32>} : memref<1x16x32xf32, #tpu.memory_space<vmem>>, vector<1x16x32xf32>,
    } else {
    }
    %c0 = arith.constant 0 : index
    %c0_1 = arith.constant 0 : index
    %c0_2 = arith.constant 0 : index
    %3 = vector.load %arg9[%c0, %c0_1, %c0_2] : memref<1x16x32xf32, #tpu.memory_space<vmem>>, vector<1x16x32xf32>
    %4 = vector.shape_cast %3 : vector<1x16x32xf32> to vector<16x32xf32>
    %c0_3 = arith.constant 0 : index
    %c0_4 = arith.constant 0 : index
    %c0_5 = arith.constant 0 : index
    %5 = vector.load %arg8[%c0_3, %c0_4, %c0_5] : memref<1x9x128xf32, #tpu.memory_space<vmem>>, vector<1x1x32xf32>
    %6 = vector.shape_cast %5 : vector<1x1x32xf32> to vector<1x32xf32>
    %c0_6 = arith.constant 0 : index
    %c1 = arith.constant 1 : index
    %c0_7 = arith.constant 0 : index
    %7 = vector.load %arg8[%c0_6, %c1, %c0_7] : memref<1x9x128xf32, #tpu.memory_space<vmem>>, vector<1x1x32xf32>
    %8 = vector.shape_cast %7 : vector<1x1x32xf32> to vector<1x32xf32>
    %cst = arith.constant dense<0.000000e+00> : vector<16xf32>
    %9 = vector.multi_reduction <add>, %4, %cst [1] : vector<16x32xf32> to vector<16xf32>
    %10 = vector.shape_cast %9 : vector<16xf32> to vector<16x1xf32>
    %cst_8 = arith.constant 3.200000e+01 : f32
    %11 = vector.broadcast %cst_8 : f32 to vector<16x1xf32>
    %12 = arith.divf %10, %11 : vector<16x1xf32>
    %13 = vector.broadcast %12 : vector<16x1xf32> to vector<16x32xf32>
    %14 = arith.subf %4, %13 : vector<16x32xf32>
    %15 = arith.mulf %14, %14 : vector<16x32xf32>
    %cst_9 = arith.constant dense<0.000000e+00> : vector<16xf32>
    %16 = vector.multi_reduction <add>, %15, %cst_9 [1] : vector<16x32xf32> to vector<16xf32>
    %17 = vector.shape_cast %16 : vector<16xf32> to vector<16x1xf32>
    %cst_10 = arith.constant 3.200000e+01 : f32
    %18 = vector.broadcast %cst_10 : f32 to vector<16x1xf32>
    %19 = arith.divf %17, %18 : vector<16x1xf32>
    %20 = vector.broadcast %12 : vector<16x1xf32> to vector<16x32xf32>
    %21 = arith.subf %4, %20 : vector<16x32xf32>
    %cst_11 = arith.constant 9.99999974E-6 : f32
    %22 = vector.broadcast %cst_11 : f32 to vector<16x1xf32>
    %23 = arith.addf %19, %22 : vector<16x1xf32>
    %24 = math.rsqrt %23 : vector<16x1xf32>
    %25 = vector.broadcast %24 : vector<16x1xf32> to vector<16x32xf32>
    %26 = arith.mulf %21, %25 : vector<16x32xf32>
    %27 = vector.broadcast %6 : vector<1x32xf32> to vector<16x32xf32>
    %28 = arith.mulf %26, %27 : vector<16x32xf32>
    %29 = vector.broadcast %8 : vector<1x32xf32> to vector<16x32xf32>
    %30 = arith.addf %28, %29 : vector<16x32xf32>
    %31 = arith.truncf %30 : vector<16x32xf32> to vector<16x32xbf16>
    %c0_12 = arith.constant 0 : index
    %c0_13 = arith.constant 0 : index
    %c0_14 = arith.constant 0 : index
    %32 = vector.load %arg5[%c0_12, %c0_13, %c0_14] : memref<1x32x608xbf16, #tpu.memory_space<vmem>>, vector<1x32x96xbf16>
    %33 = vector.shape_cast %32 : vector<1x32x96xbf16> to vector<32x96xbf16>
    %cst_15 = arith.constant dense<0.000000e+00> : vector<16x96xf32>
    %34 = tpu.matmul %31, %33, %cst_15 {dimension_numbers = #tpu.dot_dimension_numbers<[1], [0], [0], [1], [0, 0, 1, 1], [], []>} : vector<16x32xbf16>, vector<32x96xbf16>, vector<16x96xf32> -> vector<16x96xf32>
    %35 = vector.shape_cast %34 : vector<16x96xf32> to vector<1x16x96xf32>
    %cst_16 = arith.constant 0.000000e+00 : f32
    %36 = vector.broadcast %cst_16 : f32 to vector<16x32xf32>
    %37 = vector.extract_strided_slice %35 {offsets = [0, 0, 0], sizes = [1, 16, 16], strides = [1, 1, 1]} : vector<1x16x96xf32> to vector<1x16x16xf32>
    %cst_17 = arith.constant 2.500000e-01 : f32
    %38 = vector.broadcast %cst_17 : f32 to vector<1x16x16xf32>
    %39 = arith.mulf %37, %38 : vector<1x16x16xf32>
    %40 = vector.extract_strided_slice %35 {offsets = [0, 0, 32], sizes = [1, 16, 16], strides = [1, 1, 1]} : vector<1x16x96xf32> to vector<1x16x16xf32>
    %41 = vector.extract_strided_slice %35 {offsets = [0, 0, 64], sizes = [1, 16, 16], strides = [1, 1, 1]} : vector<1x16x96xf32> to vector<1x16x16xf32>
    %42 = arith.truncf %39 : vector<1x16x16xf32> to vector<1x16x16xbf16>
    %43 = arith.truncf %40 : vector<1x16x16xf32> to vector<1x16x16xbf16>
    "tpu.trace_start"() <{level = 10 : i32, message = "bqd,bkd->bqk"}> : () -> ()
    %cst_18 = arith.constant dense<0.000000e+00> : vector<1x16x16xf32>
    %44 = tpu.matmul %42, %43, %cst_18 {dimension_numbers = #tpu.dot_dimension_numbers<[2], [2], [1], [1], [0, 0, 0, 1, 1, 1], [0], [0]>} : vector<1x16x16xbf16>, vector<1x16x16xbf16>, vector<1x16x16xf32> -> vector<1x16x16xf32>
    "tpu.trace_stop"() : () -> ()
    %cst_19 = arith.constant dense<0xFF800000> : vector<1x16xf32>
    %45 = vector.multi_reduction <maximumf>, %44, %cst_19 [2] : vector<1x16x16xf32> to vector<1x16xf32>
    %46 = vector.shape_cast %45 : vector<1x16xf32> to vector<1x16x1xf32>
    %47 = vector.broadcast %46 : vector<1x16x1xf32> to vector<1x16x16xf32>
    %48 = arith.subf %44, %47 : vector<1x16x16xf32>
    %49 = math.exp %48 : vector<1x16x16xf32>
    %cst_20 = arith.constant dense<0.000000e+00> : vector<1x16xf32>
    %50 = vector.multi_reduction <add>, %49, %cst_20 [2] : vector<1x16x16xf32> to vector<1x16xf32>
    %51 = vector.shape_cast %50 : vector<1x16xf32> to vector<1x16x1xf32>
    %52 = tpu.reciprocal %51 {approx = true} : vector<1x16x1xf32> -> vector<1x16x1xf32>
    %53 = vector.broadcast %52 : vector<1x16x1xf32> to vector<1x16x16xf32>
    %54 = arith.mulf %49, %53 : vector<1x16x16xf32>
    %55 = arith.truncf %54 : vector<1x16x16xf32> to vector<1x16x16xbf16>
    %56 = arith.truncf %41 : vector<1x16x16xf32> to vector<1x16x16xbf16>
    "tpu.trace_start"() <{level = 10 : i32, message = "bqk,bkd->bqd"}> : () -> ()
    %cst_21 = arith.constant dense<0.000000e+00> : vector<1x16x16xf32>
    %57 = tpu.matmul %55, %56, %cst_21 {dimension_numbers = #tpu.dot_dimension_numbers<[2], [1], [1], [2], [0, 0, 0, 1, 1, 2], [0], [0]>} : vector<1x16x16xbf16>, vector<1x16x16xbf16>, vector<1x16x16xf32> -> vector<1x16x16xf32>
    "tpu.trace_stop"() : () -> ()
    %58 = vector.shape_cast %57 : vector<1x16x16xf32> to vector<16x16xf32>
    %59 = arith.truncf %58 : vector<16x16xf32> to vector<16x16xbf16>
    %c0_22 = arith.constant 0 : index
    %c0_23 = arith.constant 0 : index
    %c0_24 = arith.constant 0 : index
    %60 = vector.load %arg6[%c0_22, %c0_23, %c0_24] : memref<1x96x32xbf16, #tpu.memory_space<vmem>>, vector<1x16x32xbf16>
    %61 = vector.shape_cast %60 : vector<1x16x32xbf16> to vector<16x32xbf16>
    %cst_25 = arith.constant dense<0.000000e+00> : vector<16x32xf32>
    %62 = tpu.matmul %59, %61, %cst_25 {dimension_numbers = #tpu.dot_dimension_numbers<[1], [0], [0], [1], [0, 0, 1, 1], [], []>} : vector<16x16xbf16>, vector<16x32xbf16>, vector<16x32xf32> -> vector<16x32xf32>
    %63 = arith.addf %36, %62 : vector<16x32xf32>
    %64 = vector.extract_strided_slice %35 {offsets = [0, 0, 16], sizes = [1, 16, 16], strides = [1, 1, 1]} : vector<1x16x96xf32> to vector<1x16x16xf32>
    %cst_26 = arith.constant 2.500000e-01 : f32
    %65 = vector.broadcast %cst_26 : f32 to vector<1x16x16xf32>
    %66 = arith.mulf %64, %65 : vector<1x16x16xf32>
    %67 = vector.extract_strided_slice %35 {offsets = [0, 0, 48], sizes = [1, 16, 16], strides = [1, 1, 1]} : vector<1x16x96xf32> to vector<1x16x16xf32>
    %68 = vector.extract_strided_slice %35 {offsets = [0, 0, 80], sizes = [1, 16, 16], strides = [1, 1, 1]} : vector<1x16x96xf32> to vector<1x16x16xf32>
    %69 = arith.truncf %66 : vector<1x16x16xf32> to vector<1x16x16xbf16>
    %70 = arith.truncf %67 : vector<1x16x16xf32> to vector<1x16x16xbf16>
    "tpu.trace_start"() <{level = 10 : i32, message = "bqd,bkd->bqk"}> : () -> ()
    %cst_27 = arith.constant dense<0.000000e+00> : vector<1x16x16xf32>
    %71 = tpu.matmul %69, %70, %cst_27 {dimension_numbers = #tpu.dot_dimension_numbers<[2], [2], [1], [1], [0, 0, 0, 1, 1, 1], [0], [0]>} : vector<1x16x16xbf16>, vector<1x16x16xbf16>, vector<1x16x16xf32> -> vector<1x16x16xf32>
    "tpu.trace_stop"() : () -> ()
    %cst_28 = arith.constant dense<0xFF800000> : vector<1x16xf32>
    %72 = vector.multi_reduction <maximumf>, %71, %cst_28 [2] : vector<1x16x16xf32> to vector<1x16xf32>
    %73 = vector.shape_cast %72 : vector<1x16xf32> to vector<1x16x1xf32>
    %74 = vector.broadcast %73 : vector<1x16x1xf32> to vector<1x16x16xf32>
    %75 = arith.subf %71, %74 : vector<1x16x16xf32>
    %76 = math.exp %75 : vector<1x16x16xf32>
    %cst_29 = arith.constant dense<0.000000e+00> : vector<1x16xf32>
    %77 = vector.multi_reduction <add>, %76, %cst_29 [2] : vector<1x16x16xf32> to vector<1x16xf32>
    %78 = vector.shape_cast %77 : vector<1x16xf32> to vector<1x16x1xf32>
    %79 = tpu.reciprocal %78 {approx = true} : vector<1x16x1xf32> -> vector<1x16x1xf32>
    %80 = vector.broadcast %79 : vector<1x16x1xf32> to vector<1x16x16xf32>
    %81 = arith.mulf %76, %80 : vector<1x16x16xf32>
    %82 = arith.truncf %81 : vector<1x16x16xf32> to vector<1x16x16xbf16>
    %83 = arith.truncf %68 : vector<1x16x16xf32> to vector<1x16x16xbf16>
    "tpu.trace_start"() <{level = 10 : i32, message = "bqk,bkd->bqd"}> : () -> ()
    %cst_30 = arith.constant dense<0.000000e+00> : vector<1x16x16xf32>
    %84 = tpu.matmul %82, %83, %cst_30 {dimension_numbers = #tpu.dot_dimension_numbers<[2], [1], [1], [2], [0, 0, 0, 1, 1, 2], [0], [0]>} : vector<1x16x16xbf16>, vector<1x16x16xbf16>, vector<1x16x16xf32> -> vector<1x16x16xf32>
    "tpu.trace_stop"() : () -> ()
    %85 = vector.shape_cast %84 : vector<1x16x16xf32> to vector<16x16xf32>
    %86 = arith.truncf %85 : vector<16x16xf32> to vector<16x16xbf16>
    %c0_31 = arith.constant 0 : index
    %c16 = arith.constant 16 : index
    %c0_32 = arith.constant 0 : index
    %87 = vector.load %arg6[%c0_31, %c16, %c0_32] : memref<1x96x32xbf16, #tpu.memory_space<vmem>>, vector<1x16x32xbf16>
    %88 = vector.shape_cast %87 : vector<1x16x32xbf16> to vector<16x32xbf16>
    %cst_33 = arith.constant dense<0.000000e+00> : vector<16x32xf32>
    %89 = tpu.matmul %86, %88, %cst_33 {dimension_numbers = #tpu.dot_dimension_numbers<[1], [0], [0], [1], [0, 0, 1, 1], [], []>} : vector<16x16xbf16>, vector<16x32xbf16>, vector<16x32xf32> -> vector<16x32xf32>
    %90 = arith.addf %63, %89 : vector<16x32xf32>
    %91 = arith.addf %4, %90 : vector<16x32xf32>
    %c0_34 = arith.constant 0 : index
    %c2 = arith.constant 2 : index
    %c0_35 = arith.constant 0 : index
    %92 = vector.load %arg8[%c0_34, %c2, %c0_35] : memref<1x9x128xf32, #tpu.memory_space<vmem>>, vector<1x1x32xf32>
    %93 = vector.shape_cast %92 : vector<1x1x32xf32> to vector<1x32xf32>
    %94 = vector.broadcast %93 : vector<1x32xf32> to vector<16x32xf32>
    %95 = arith.addf %91, %94 : vector<16x32xf32>
    %96 = arith.truncf %95 : vector<16x32xf32> to vector<16x32xbf16>
    %c0_36 = arith.constant 0 : index
    %c0_37 = arith.constant 0 : index
    %c96 = arith.constant 96 : index
    %97 = vector.load %arg5[%c0_36, %c0_37, %c96] : memref<1x32x608xbf16, #tpu.memory_space<vmem>>, vector<1x32x128xbf16>
    %98 = vector.shape_cast %97 : vector<1x32x128xbf16> to vector<32x128xbf16>
    %cst_38 = arith.constant dense<0.000000e+00> : vector<16x128xf32>
    %99 = tpu.matmul %96, %98, %cst_38 {dimension_numbers = #tpu.dot_dimension_numbers<[1], [0], [0], [1], [0, 0, 1, 1], [], []>} : vector<16x32xbf16>, vector<32x128xbf16>, vector<16x128xf32> -> vector<16x128xf32>
    %c0_39 = arith.constant 0 : index
    %c3 = arith.constant 3 : index
    %c0_40 = arith.constant 0 : index
    %100 = vector.load %arg8[%c0_39, %c3, %c0_40] : memref<1x9x128xf32, #tpu.memory_space<vmem>>, vector<1x1x128xf32>
    %101 = vector.shape_cast %100 : vector<1x1x128xf32> to vector<1x128xf32>
    %102 = vector.broadcast %101 : vector<1x128xf32> to vector<16x128xf32>
    %103 = arith.addf %99, %102 : vector<16x128xf32>
    %cst_41 = arith.constant dense<0xFF800000> : vector<16xf32>
    %104 = vector.multi_reduction <maximumf>, %103, %cst_41 [1] : vector<16x128xf32> to vector<16xf32>
    %105 = vector.shape_cast %104 : vector<16xf32> to vector<16x1xf32>
    %106 = vector.broadcast %105 : vector<16x1xf32> to vector<16x128xf32>
    %107 = arith.cmpf oge, %103, %106 : vector<16x128xf32>
    %cst_42 = arith.constant -1.000000e+30 : f32
    %108 = vector.broadcast %cst_42 : f32 to vector<16x128xf32>
    %109 = arith.select %107, %108, %103 : vector<16x128xi1>, vector<16x128xf32>
    %cst_43 = arith.constant dense<0xFF800000> : vector<16xf32>
    %110 = vector.multi_reduction <maximumf>, %109, %cst_43 [1] : vector<16x128xf32> to vector<16xf32>
    %111 = vector.shape_cast %110 : vector<16xf32> to vector<16x1xf32>
    %112 = vector.broadcast %111 : vector<16x1xf32> to vector<16x128xf32>
    %113 = arith.cmpf oge, %103, %112 : vector<16x128xf32>
    %cst_44 = arith.constant -1.000000e+30 : f32
    %114 = vector.broadcast %cst_44 : f32 to vector<16x128xf32>
    %115 = arith.select %113, %103, %114 : vector<16x128xi1>, vector<16x128xf32>
    %cst_45 = arith.constant dense<0xFF800000> : vector<16xf32>
    %116 = vector.multi_reduction <maximumf>, %115, %cst_45 [1] : vector<16x128xf32> to vector<16xf32>
    %117 = vector.shape_cast %116 : vector<16xf32> to vector<16x1xf32>
    %118 = vector.broadcast %117 : vector<16x1xf32> to vector<16x128xf32>
    %119 = arith.subf %115, %118 : vector<16x128xf32>
    %120 = math.exp %119 : vector<16x128xf32>
    %cst_46 = arith.constant dense<0.000000e+00> : vector<16xf32>
    %121 = vector.multi_reduction <add>, %120, %cst_46 [1] : vector<16x128xf32> to vector<16xf32>
    %122 = vector.shape_cast %121 : vector<16xf32> to vector<16x1xf32>
    %123 = vector.broadcast %122 : vector<16x1xf32> to vector<16x128xf32>
    %124 = arith.divf %120, %123 : vector<16x128xf32>
    %125 = vector.extract_strided_slice %124 {offsets = [0, 0], sizes = [16, 4], strides = [1, 1]} : vector<16x128xf32> to vector<16x4xf32>
    %126 = vector.shape_cast %125 : vector<16x4xf32> to vector<1x16x4xf32>
    %c0_47 = arith.constant 0 : index
    %c0_48 = arith.constant 0 : index
    %c0_49 = arith.constant 0 : index
    %c0_50 = arith.constant 0 : index
    %127 = vector.load %arg10[%c0_47, %c0_48, %c0_49, %c0_50] : memref<1x1x16x4xf32, #tpu.memory_space<vmem>>, vector<1x1x16x4xf32>
    %128 = vector.shape_cast %127 : vector<1x1x16x4xf32> to vector<1x16x4xf32>
    %129 = vector.shape_cast %126 : vector<1x16x4xf32> to vector<1x1x16x4xf32>
    tpu.vector_store %arg10[%c0_47, %c0_48, %c0_49, %c0_50], %129 {strides = array<i32>} : memref<1x1x16x4xf32, #tpu.memory_space<vmem>>, vector<1x1x16x4xf32>,
    %c0_51 = arith.constant 0 : index
    %c4 = arith.constant 4 : index
    %c0_52 = arith.constant 0 : index
    %130 = vector.load %arg8[%c0_51, %c4, %c0_52] : memref<1x9x128xf32, #tpu.memory_space<vmem>>, vector<1x1x32xf32>
    %131 = vector.shape_cast %130 : vector<1x1x32xf32> to vector<1x32xf32>
    %c0_53 = arith.constant 0 : index
    %c5 = arith.constant 5 : index
    %c0_54 = arith.constant 0 : index
    %132 = vector.load %arg8[%c0_53, %c5, %c0_54] : memref<1x9x128xf32, #tpu.memory_space<vmem>>, vector<1x1x32xf32>
    %133 = vector.shape_cast %132 : vector<1x1x32xf32> to vector<1x32xf32>
    %cst_55 = arith.constant dense<0.000000e+00> : vector<16xf32>
    %134 = vector.multi_reduction <add>, %95, %cst_55 [1] : vector<16x32xf32> to vector<16xf32>
    %135 = vector.shape_cast %134 : vector<16xf32> to vector<16x1xf32>
    %cst_56 = arith.constant 3.200000e+01 : f32
    %136 = vector.broadcast %cst_56 : f32 to vector<16x1xf32>
    %137 = arith.divf %135, %136 : vector<16x1xf32>
    %138 = vector.broadcast %137 : vector<16x1xf32> to vector<16x32xf32>
    %139 = arith.subf %95, %138 : vector<16x32xf32>
    %140 = arith.mulf %139, %139 : vector<16x32xf32>
    %cst_57 = arith.constant dense<0.000000e+00> : vector<16xf32>
    %141 = vector.multi_reduction <add>, %140, %cst_57 [1] : vector<16x32xf32> to vector<16xf32>
    %142 = vector.shape_cast %141 : vector<16xf32> to vector<16x1xf32>
    %cst_58 = arith.constant 3.200000e+01 : f32
    %143 = vector.broadcast %cst_58 : f32 to vector<16x1xf32>
    %144 = arith.divf %142, %143 : vector<16x1xf32>
    %145 = vector.broadcast %137 : vector<16x1xf32> to vector<16x32xf32>
    %146 = arith.subf %95, %145 : vector<16x32xf32>
    %cst_59 = arith.constant 9.99999974E-6 : f32
    %147 = vector.broadcast %cst_59 : f32 to vector<16x1xf32>
    %148 = arith.addf %144, %147 : vector<16x1xf32>
    %149 = math.rsqrt %148 : vector<16x1xf32>
    %150 = vector.broadcast %149 : vector<16x1xf32> to vector<16x32xf32>
    %151 = arith.mulf %146, %150 : vector<16x32xf32>
    %152 = vector.broadcast %131 : vector<1x32xf32> to vector<16x32xf32>
    %153 = arith.mulf %151, %152 : vector<16x32xf32>
    %154 = vector.broadcast %133 : vector<1x32xf32> to vector<16x32xf32>
    %155 = arith.addf %153, %154 : vector<16x32xf32>
    %156 = arith.truncf %155 : vector<16x32xf32> to vector<16x32xbf16>
    %c0_60 = arith.constant 0 : index
    %c0_61 = arith.constant 0 : index
    %c224 = arith.constant 224 : index
    %157 = vector.load %arg5[%c0_60, %c0_61, %c224] : memref<1x32x608xbf16, #tpu.memory_space<vmem>>, vector<1x32x64xbf16>
    %158 = vector.shape_cast %157 : vector<1x32x64xbf16> to vector<32x64xbf16>
    %cst_62 = arith.constant dense<0.000000e+00> : vector<16x64xf32>
    %159 = tpu.matmul %156, %158, %cst_62 {dimension_numbers = #tpu.dot_dimension_numbers<[1], [0], [0], [1], [0, 0, 1, 1], [], []>} : vector<16x32xbf16>, vector<32x64xbf16>, vector<16x64xf32> -> vector<16x64xf32>
    %c0_63 = arith.constant 0 : index
    %c6 = arith.constant 6 : index
    %c0_64 = arith.constant 0 : index
    %160 = vector.load %arg8[%c0_63, %c6, %c0_64] : memref<1x9x128xf32, #tpu.memory_space<vmem>>, vector<1x1x64xf32>
    %161 = vector.shape_cast %160 : vector<1x1x64xf32> to vector<1x64xf32>
    %162 = vector.broadcast %161 : vector<1x64xf32> to vector<16x64xf32>
    %163 = arith.addf %159, %162 : vector<16x64xf32>
    %164 = vector.extract_strided_slice %163 {offsets = [0, 0], sizes = [16, 32], strides = [1, 1]} : vector<16x64xf32> to vector<16x32xf32>
    %cst_65 = arith.constant 5.000000e-01 : f32
    %165 = vector.broadcast %cst_65 : f32 to vector<16x32xf32>
    %166 = arith.mulf %165, %164 : vector<16x32xf32>
    %cst_66 = arith.constant 4.471500e-02 : f32
    %167 = vector.broadcast %cst_66 : f32 to vector<16x32xf32>
    %168 = arith.mulf %167, %164 : vector<16x32xf32>
    %169 = arith.mulf %168, %164 : vector<16x32xf32>
    %170 = arith.mulf %169, %164 : vector<16x32xf32>
    %171 = arith.addf %164, %170 : vector<16x32xf32>
    %cst_67 = arith.constant 0.797884583 : f32
    %172 = vector.broadcast %cst_67 : f32 to vector<16x32xf32>
    %173 = arith.mulf %172, %171 : vector<16x32xf32>
    %174 = math.tanh %173 : vector<16x32xf32>
    %cst_68 = arith.constant 1.000000e+00 : f32
    %175 = vector.broadcast %cst_68 : f32 to vector<16x32xf32>
    %176 = arith.addf %175, %174 : vector<16x32xf32>
    %177 = arith.mulf %166, %176 : vector<16x32xf32>
    %178 = vector.extract_strided_slice %163 {offsets = [0, 32], sizes = [16, 32], strides = [1, 1]} : vector<16x64xf32> to vector<16x32xf32>
    %179 = arith.mulf %177, %178 : vector<16x32xf32>
    %180 = arith.truncf %179 : vector<16x32xf32> to vector<16x32xbf16>
    %c0_69 = arith.constant 0 : index
    %c0_70 = arith.constant 0 : index
    %c288 = arith.constant 288 : index
    %181 = vector.load %arg5[%c0_69, %c0_70, %c288] : memref<1x32x608xbf16, #tpu.memory_space<vmem>>, vector<1x32x256xbf16>
    %182 = vector.shape_cast %181 : vector<1x32x256xbf16> to vector<32x256xbf16>
    %cst_71 = arith.constant dense<0.000000e+00> : vector<16x256xf32>
    %183 = tpu.matmul %180, %182, %cst_71 {dimension_numbers = #tpu.dot_dimension_numbers<[1], [0], [0], [1], [0, 0, 1, 1], [], []>} : vector<16x32xbf16>, vector<32x256xbf16>, vector<16x256xf32> -> vector<16x256xf32>
    %184 = arith.truncf %124 : vector<16x128xf32> to vector<16x128xbf16>
    %c0_72 = arith.constant 0 : index
    %c0_73 = arith.constant 0 : index
    %c0_74 = arith.constant 0 : index
    %185 = vector.load %arg7[%c0_72, %c0_73, %c0_74] : memref<1x128x64xbf16, #tpu.memory_space<vmem>>, vector<1x128x64xbf16>
    %186 = vector.shape_cast %185 : vector<1x128x64xbf16> to vector<128x64xbf16>
    %cst_75 = arith.constant dense<0.000000e+00> : vector<16x64xf32>
    %187 = tpu.matmul %184, %186, %cst_75 {dimension_numbers = #tpu.dot_dimension_numbers<[1], [0], [0], [1], [0, 0, 1, 1], [], []>} : vector<16x128xbf16>, vector<128x64xbf16>, vector<16x64xf32> -> vector<16x64xf32>
    %188 = vector.extract_strided_slice %187 {offsets = [0, 0], sizes = [16, 32], strides = [1, 1]} : vector<16x64xf32> to vector<16x32xf32>
    %189 = vector.extract_strided_slice %187 {offsets = [0, 32], sizes = [16, 32], strides = [1, 1]} : vector<16x64xf32> to vector<16x32xf32>
    %190 = vector.extract_strided_slice %124 {offsets = [0, 0], sizes = [16, 1], strides = [1, 1]} : vector<16x128xf32> to vector<16x1xf32>
    %191 = vector.extract_strided_slice %183 {offsets = [0, 0], sizes = [16, 32], strides = [1, 1]} : vector<16x256xf32> to vector<16x32xf32>
    %192 = vector.broadcast %190 : vector<16x1xf32> to vector<16x32xf32>
    %193 = arith.mulf %192, %191 : vector<16x32xf32>
    %194 = arith.addf %188, %193 : vector<16x32xf32>
    %195 = vector.extract_strided_slice %183 {offsets = [0, 128], sizes = [16, 32], strides = [1, 1]} : vector<16x256xf32> to vector<16x32xf32>
    %196 = vector.broadcast %190 : vector<16x1xf32> to vector<16x32xf32>
    %197 = arith.mulf %196, %195 : vector<16x32xf32>
    %198 = arith.addf %189, %197 : vector<16x32xf32>
    %199 = vector.extract_strided_slice %124 {offsets = [0, 1], sizes = [16, 1], strides = [1, 1]} : vector<16x128xf32> to vector<16x1xf32>
    %200 = vector.extract_strided_slice %183 {offsets = [0, 32], sizes = [16, 32], strides = [1, 1]} : vector<16x256xf32> to vector<16x32xf32>
    %201 = vector.broadcast %199 : vector<16x1xf32> to vector<16x32xf32>
    %202 = arith.mulf %201, %200 : vector<16x32xf32>
    %203 = arith.addf %194, %202 : vector<16x32xf32>
    %204 = vector.extract_strided_slice %183 {offsets = [0, 160], sizes = [16, 32], strides = [1, 1]} : vector<16x256xf32> to vector<16x32xf32>
    %205 = vector.broadcast %199 : vector<16x1xf32> to vector<16x32xf32>
    %206 = arith.mulf %205, %204 : vector<16x32xf32>
    %207 = arith.addf %198, %206 : vector<16x32xf32>
    %208 = vector.extract_strided_slice %124 {offsets = [0, 2], sizes = [16, 1], strides = [1, 1]} : vector<16x128xf32> to vector<16x1xf32>
    %209 = vector.extract_strided_slice %183 {offsets = [0, 64], sizes = [16, 32], strides = [1, 1]} : vector<16x256xf32> to vector<16x32xf32>
    %210 = vector.broadcast %208 : vector<16x1xf32> to vector<16x32xf32>
    %211 = arith.mulf %210, %209 : vector<16x32xf32>
    %212 = arith.addf %203, %211 : vector<16x32xf32>
    %213 = vector.extract_strided_slice %183 {offsets = [0, 192], sizes = [16, 32], strides = [1, 1]} : vector<16x256xf32> to vector<16x32xf32>
    %214 = vector.broadcast %208 : vector<16x1xf32> to vector<16x32xf32>
    %215 = arith.mulf %214, %213 : vector<16x32xf32>
    %216 = arith.addf %207, %215 : vector<16x32xf32>
    %217 = vector.extract_strided_slice %124 {offsets = [0, 3], sizes = [16, 1], strides = [1, 1]} : vector<16x128xf32> to vector<16x1xf32>
    %218 = vector.extract_strided_slice %183 {offsets = [0, 96], sizes = [16, 32], strides = [1, 1]} : vector<16x256xf32> to vector<16x32xf32>
    %219 = vector.broadcast %217 : vector<16x1xf32> to vector<16x32xf32>
    %220 = arith.mulf %219, %218 : vector<16x32xf32>
    %221 = arith.addf %212, %220 : vector<16x32xf32>
    %222 = vector.extract_strided_slice %183 {offsets = [0, 224], sizes = [16, 32], strides = [1, 1]} : vector<16x256xf32> to vector<16x32xf32>
    %223 = vector.broadcast %217 : vector<16x1xf32> to vector<16x32xf32>
    %224 = arith.mulf %223, %222 : vector<16x32xf32>
    %225 = arith.addf %216, %224 : vector<16x32xf32>
    %226 = arith.mulf %221, %179 : vector<16x32xf32>
    %227 = arith.addf %226, %225 : vector<16x32xf32>
    %228 = arith.truncf %227 : vector<16x32xf32> to vector<16x32xbf16>
    %c0_76 = arith.constant 0 : index
    %c0_77 = arith.constant 0 : index
    %c544 = arith.constant 544 : index
    %229 = vector.load %arg5[%c0_76, %c0_77, %c544] : memref<1x32x608xbf16, #tpu.memory_space<vmem>>, vector<1x32x64xbf16>
    %230 = vector.shape_cast %229 : vector<1x32x64xbf16> to vector<32x64xbf16>
    %cst_78 = arith.constant dense<0.000000e+00> : vector<16x64xf32>
    %231 = tpu.matmul %228, %230, %cst_78 {dimension_numbers = #tpu.dot_dimension_numbers<[1], [0], [0], [1], [0, 0, 1, 1], [], []>} : vector<16x32xbf16>, vector<32x64xbf16>, vector<16x64xf32> -> vector<16x64xf32>
    %c0_79 = arith.constant 0 : index
    %c7 = arith.constant 7 : index
    %c0_80 = arith.constant 0 : index
    %232 = vector.load %arg8[%c0_79, %c7, %c0_80] : memref<1x9x128xf32, #tpu.memory_space<vmem>>, vector<1x1x64xf32>
    %233 = vector.shape_cast %232 : vector<1x1x64xf32> to vector<1x64xf32>
    %234 = vector.broadcast %233 : vector<1x64xf32> to vector<16x64xf32>
    %235 = arith.addf %231, %234 : vector<16x64xf32>
    %cst_81 = arith.constant 5.000000e-01 : f32
    %236 = vector.broadcast %cst_81 : f32 to vector<16x64xf32>
    %237 = arith.mulf %236, %235 : vector<16x64xf32>
    %cst_82 = arith.constant 4.471500e-02 : f32
    %238 = vector.broadcast %cst_82 : f32 to vector<16x64xf32>
    %239 = arith.mulf %238, %235 : vector<16x64xf32>
    %240 = arith.mulf %239, %235 : vector<16x64xf32>
    %241 = arith.mulf %240, %235 : vector<16x64xf32>
    %242 = arith.addf %235, %241 : vector<16x64xf32>
    %cst_83 = arith.constant 0.797884583 : f32
    %243 = vector.broadcast %cst_83 : f32 to vector<16x64xf32>
    %244 = arith.mulf %243, %242 : vector<16x64xf32>
    %245 = math.tanh %244 : vector<16x64xf32>
    %cst_84 = arith.constant 1.000000e+00 : f32
    %246 = vector.broadcast %cst_84 : f32 to vector<16x64xf32>
    %247 = arith.addf %246, %245 : vector<16x64xf32>
    %248 = arith.mulf %237, %247 : vector<16x64xf32>
    %249 = arith.truncf %248 : vector<16x64xf32> to vector<16x64xbf16>
    %c0_85 = arith.constant 0 : index
    %c32 = arith.constant 32 : index
    %c0_86 = arith.constant 0 : index
    %250 = vector.load %arg6[%c0_85, %c32, %c0_86] : memref<1x96x32xbf16, #tpu.memory_space<vmem>>, vector<1x64x32xbf16>
    %251 = vector.shape_cast %250 : vector<1x64x32xbf16> to vector<64x32xbf16>
    %cst_87 = arith.constant dense<0.000000e+00> : vector<16x32xf32>
    %252 = tpu.matmul %249, %251, %cst_87 {dimension_numbers = #tpu.dot_dimension_numbers<[1], [0], [0], [1], [0, 0, 1, 1], [], []>} : vector<16x64xbf16>, vector<64x32xbf16>, vector<16x32xf32> -> vector<16x32xf32>
    %c0_88 = arith.constant 0 : index
    %c8 = arith.constant 8 : index
    %c0_89 = arith.constant 0 : index
    %253 = vector.load %arg8[%c0_88, %c8, %c0_89] : memref<1x9x128xf32, #tpu.memory_space<vmem>>, vector<1x1x32xf32>
    %254 = vector.shape_cast %253 : vector<1x1x32xf32> to vector<1x32xf32>
    %255 = vector.broadcast %254 : vector<1x32xf32> to vector<16x32xf32>
    %256 = arith.addf %252, %255 : vector<16x32xf32>
    %257 = arith.addf %95, %256 : vector<16x32xf32>
    %258 = vector.shape_cast %257 : vector<16x32xf32> to vector<1x16x32xf32>
    %c0_90 = arith.constant 0 : index
    %c0_91 = arith.constant 0 : index
    %c0_92 = arith.constant 0 : index
    %259 = vector.load %arg9[%c0_90, %c0_91, %c0_92] : memref<1x16x32xf32, #tpu.memory_space<vmem>>, vector<1x16x32xf32>
    tpu.vector_store %arg9[%c0_90, %c0_91, %c0_92], %258 {strides = array<i32>} : memref<1x16x32xf32, #tpu.memory_space<vmem>>, vector<1x16x32xf32>,
    return
  }
  func.func @transform_0(%arg0: i32, %arg1: i32) -> (i32, i32, i32) {
    %c0_i32 = arith.constant 0 : i32
    %c0_i32_0 = arith.constant 0 : i32
    %c0_i32_1 = arith.constant 0 : i32
    return %arg0, %c0_i32, %c0_i32_0 : i32, i32, i32
  }
  func.func @transform_1(%arg0: i32, %arg1: i32) -> (i32, i32) {
    %c0_i32 = arith.constant 0 : i32
    %c0_i32_0 = arith.constant 0 : i32
    %c0_i32_1 = arith.constant 0 : i32
    return %c0_i32, %c0_i32_0 : i32, i32
  }
  func.func @transform_2(%arg0: i32, %arg1: i32) -> (i32, i32) {
    %c0_i32 = arith.constant 0 : i32
    %c0_i32_0 = arith.constant 0 : i32
    %c0_i32_1 = arith.constant 0 : i32
    return %c0_i32, %c0_i32_0 : i32, i32
  }
  func.func @transform_3(%arg0: i32, %arg1: i32) -> (i32, i32, i32) {
    %c0_i32 = arith.constant 0 : i32
    %c0_i32_0 = arith.constant 0 : i32
    %c0_i32_1 = arith.constant 0 : i32
    return %arg1, %c0_i32, %c0_i32_0 : i32, i32, i32
  }
  func.func @transform_4(%arg0: i32, %arg1: i32) -> (i32, i32, i32) {
    %c0_i32 = arith.constant 0 : i32
    %c0_i32_0 = arith.constant 0 : i32
    %c0_i32_1 = arith.constant 0 : i32
    return %arg1, %c0_i32, %c0_i32_0 : i32, i32, i32
  }
  func.func @transform_5(%arg0: i32, %arg1: i32) -> (i32, i32, i32) {
    %c0_i32 = arith.constant 0 : i32
    %c0_i32_0 = arith.constant 0 : i32
    %c0_i32_1 = arith.constant 0 : i32
    return %arg1, %c0_i32, %c0_i32_0 : i32, i32, i32
  }
  func.func @transform_6(%arg0: i32, %arg1: i32) -> (i32, i32, i32) {
    %c0_i32 = arith.constant 0 : i32
    %c0_i32_0 = arith.constant 0 : i32
    %c0_i32_1 = arith.constant 0 : i32
    return %arg1, %c0_i32, %c0_i32_0 : i32, i32, i32
  }
  func.func @transform_7(%arg0: i32, %arg1: i32) -> (i32, i32, i32) {
    %c0_i32 = arith.constant 0 : i32
    %c0_i32_0 = arith.constant 0 : i32
    %c0_i32_1 = arith.constant 0 : i32
    return %arg0, %c0_i32, %c0_i32_0 : i32, i32, i32
  }
  func.func @transform_8(%arg0: i32, %arg1: i32) -> (i32, i32, i32, i32) {
    %c0_i32 = arith.constant 0 : i32
    %c0_i32_0 = arith.constant 0 : i32
    %c0_i32_1 = arith.constant 0 : i32
    return %arg1, %arg0, %c0_i32, %c0_i32_0 : i32, i32, i32, i32
  }
}

</mosaic_0001>

<llo_original>
// kernel: tpu_custom_call.1
$region0: #{tpu_custom_call.1}
  #allocation0 [shape = 'u32[]', space=smem, size = 0x4, offset = 0x4, fixed_abs, tag = 'smem constant byte address 0x4 - core index']
  #allocation1 [shape = 'u32[72,128]{1,0:T(1,128)}', space=vmem, size = 0x9000, scoped, tag = 'internal scratch']
  %s0 = inlined_call_operand.vmem [shape: bf16[2,16,48], index: 0, kind: input, shape index: {}]
  %s1 = inlined_call_operand.vmem [shape: bf16[48,32], index: 1, kind: input, shape index: {}]
  %s2 = inlined_call_operand.vmem [shape: f32[1,32], index: 2, kind: input, shape index: {}]
  %s3 = inlined_call_operand.vmem [shape: bf16[2,32,608], index: 3, kind: input, shape index: {}]
  %s4 = inlined_call_operand.vmem [shape: bf16[2,96,32], index: 4, kind: input, shape index: {}]
  %s5 = inlined_call_operand.vmem [shape: bf16[2,128,64], index: 5, kind: input, shape index: {}]
  %s6 = inlined_call_operand.vmem [shape: f32[2,9,128], index: 6, kind: input, shape index: {}]
  %s7 = inlined_call_operand.hbm [shape: f32[2,16,32], index: 7, kind: output, shape index: {0}]
  %s8 = inlined_call_operand.vmem [shape: f32[2,2,16,4], index: 8, kind: output, shape index: {1}]
  %9 = xla_tuple %s7, %s8
  %s10 = sld [smem:[#allocation0]]
  $region73: #{tpu_custom_call.1} parent=0
    _
  %s12 = ssub.s32 1, %s10
  %s13 = scalar_select 0, %s12, %s10
  $region1: #{tpu_custom_call.1} parent=0
    #allocation2 [shape = 'u8[16384]{0}', space=vmem, size = 0x4000, scoped, tag = 'output window, operand 0']
    #allocation3 [shape = 's32[2]{0}', space=sflag, size = 0x8, scoped, tag = 'scoped memory for tpu_custom_call.1']
    %14 = vsyncpa [#allocation3], 0
    %s15 = scalar_lea.sflag [#allocation3], 1
    %16 = vsyncpa %s15, 0
    loop: start=0, step=1, limit=6
    $region2: #{tpu_custom_call.1} parent=1 // loop_pre_header
      _
    $region3: #{tpu_custom_call.1} parent=1 // loop_header
      %s18 = sphi 0, %s22
      %p19 = scmp.ge.s32.totalorder %s18, 6
      %s25 = sphi 0, %s37
      %s26 = sphi 0, %s33
      %s27 = sphi 0, %s25
      %s28 = sphi 0, %s26
      %s29 = sphi 0, %s27
      %s30 = sphi 0, %s28
      %s40 = sphi 0, %s42
      %s43 = sphi 0, %s40
      %s44 = sphi 0, %s43
      %s60 = sphi 0, %s44
      %s64 = sphi 0, %s64
      %s66 = sphi 0, %s64
      %s67 = sphi 0, %s66
      %s81 = sphi 0, %s67
      %s85 = sphi 0, %s85
      %s87 = sphi 0, %s85
      %s88 = sphi 0, %s87
      %s102 = sphi 0, %s88
      %s108 = sphi 0, %s110
      %s111 = sphi 0, %s108
      %s112 = sphi 0, %s111
      %s128 = sphi 0, %s112
      %s134 = sphi 0, %s136
      %s137 = sphi 0, %s134
      %s138 = sphi 0, %s137
      %s154 = sphi 0, %s138
      %s160 = sphi 0, %s162
      %s163 = sphi 0, %s160
      %s164 = sphi 0, %s163
      %s180 = sphi 0, %s164
      %s186 = sphi 0, %s188
      %s189 = sphi 0, %s186
      %s190 = sphi 0, %s189
      %s206 = sphi 0, %s190
      %s212 = sphi 0, %s214
      %s215 = sphi 0, %s212
      %s216 = sphi 0, %s215
      %s232 = sphi 0, %s216
      %s240 = sphi 0, %s242
      %s243 = sphi 0, %s240
      %s244 = sphi 0, %s243
      %s260 = sphi 0, %s244
    $region4: #{tpu_custom_call.1} parent=1 // loop_header_branch
      %21 = sbr.rel (%p19) target = $region8
    $region5: #{tpu_custom_call.1} parent=1 // loop_body
      %s23 = ssub.s32 %s18, 1
      %s24 = ssub.s32 %s18, 2
      %s31 = sadd.s32 1, %s26
      %p32 = scmp.ge.s32.totalorder %s31, 2
      %s33 = scalar_select %p32, 0, %s31
      %s34 = sadd.s32 1, %s25
      %s35 = scalar_select %p32, %s34, %s25
      %p36 = scmp.ge.s32.totalorder %s35, 2
      %s37 = scalar_select %p36, 0, %s35
      %s38 = ssub.s32 %s25, %s37
      %p39 = scmp.eq.s32.totalorder %s38, 0
      %s41 = sadd.s32 %s40, 1
      %s42 = scalar_select %p39, %s40, %s41
      %p45 = pneg %p39
      %p46 = scmp.eq.s32.totalorder %s18, 3
      %p47 = por %p45, %p46
      %p48 = scmp.ne.s32.totalorder %s40, %s43
      %p49 = scmp.eq.s32.totalorder %s18, 0
      %p50 = por %p48, %p49
      %p51 = scmp.ne.s32.totalorder %s40, %s43
      %p52 = scmp.eq.s32.totalorder %s23, 3
      %p53 = por %p51, %p52
      %p54 = scmp.ne.s32.totalorder %s43, %s44
      %p55 = scmp.eq.s32.totalorder %s23, 0
      %p56 = por %p54, %p55
      %p57 = scmp.ne.s32.totalorder %s43, %s44
      %p58 = scmp.eq.s32.totalorder %s24, 3
      %p59 = por %p57, %p58
      %p61 = scmp.ne.s32.totalorder %s44, %s60
      %p62 = scmp.eq.s32.totalorder %s24, 0
      %p63 = por %p61, %p62
      %s65 = sadd.s32 %s64, 1
      %p68 = scmp.eq.s32.totalorder %s18, 3
      %p69 = scmp.ne.s32.totalorder %s64, %s66
      %p70 = scmp.eq.s32.totalorder %s18, 0
      %p71 = por %p69, %p70
      %p72 = scmp.ne.s32.totalorder %s64, %s66
      %p73 = scmp.eq.s32.totalorder %s23, 3
      %p74 = por %p72, %p73
      %p75 = scmp.ne.s32.totalorder %s66, %s67
      %p76 = scmp.eq.s32.totalorder %s23, 0
      %p77 = por %p75, %p76
      %p78 = scmp.ne.s32.totalorder %s66, %s67
      %p79 = scmp.eq.s32.totalorder %s24, 3
      %p80 = por %p78, %p79
      %p82 = scmp.ne.s32.totalorder %s67, %s81
      %p83 = scmp.eq.s32.totalorder %s24, 0
      %p84 = por %p82, %p83
      %s86 = sadd.s32 %s85, 1
      %p89 = scmp.eq.s32.totalorder %s18, 3
      %p90 = scmp.ne.s32.totalorder %s85, %s87
      %p91 = scmp.eq.s32.totalorder %s18, 0
      %p92 = por %p90, %p91
      %p93 = scmp.ne.s32.totalorder %s85, %s87
      %p94 = scmp.eq.s32.totalorder %s23, 3
      %p95 = por %p93, %p94
      %p96 = scmp.ne.s32.totalorder %s87, %s88
      %p97 = scmp.eq.s32.totalorder %s23, 0
      %p98 = por %p96, %p97
      %p99 = scmp.ne.s32.totalorder %s87, %s88
      %p100 = scmp.eq.s32.totalorder %s24, 3
      %p101 = por %p99, %p100
      %p103 = scmp.ne.s32.totalorder %s88, %s102
      %p104 = scmp.eq.s32.totalorder %s24, 0
      %p105 = por %p103, %p104
      %s106 = ssub.s32 %s26, %s33
      %p107 = scmp.eq.s32.totalorder %s106, 0
      %s109 = sadd.s32 %s108, 1
      %s110 = scalar_select %p107, %s108, %s109
      %p113 = pneg %p107
      %p114 = scmp.eq.s32.totalorder %s18, 3
      %p115 = por %p113, %p114
      %p116 = scmp.ne.s32.totalorder %s108, %s111
      %p117 = scmp.eq.s32.totalorder %s18, 0
      %p118 = por %p116, %p117
      %p119 = scmp.ne.s32.totalorder %s108, %s111
      %p120 = scmp.eq.s32.totalorder %s23, 3
      %p121 = por %p119, %p120
      %p122 = scmp.ne.s32.totalorder %s111, %s112
      %p123 = scmp.eq.s32.totalorder %s23, 0
      %p124 = por %p122, %p123
      %p125 = scmp.ne.s32.totalorder %s111, %s112
      %p126 = scmp.eq.s32.totalorder %s24, 3
      %p127 = por %p125, %p126
      %p129 = scmp.ne.s32.totalorder %s112, %s128
      %p130 = scmp.eq.s32.totalorder %s24, 0
      %p131 = por %p129, %p130
      %s132 = ssub.s32 %s26, %s33
      %p133 = scmp.eq.s32.totalorder %s132, 0
      %s135 = sadd.s32 %s134, 1
      %s136 = scalar_select %p133, %s134, %s135
      %p139 = pneg %p133
      %p140 = scmp.eq.s32.totalorder %s18, 3
      %p141 = por %p139, %p140
      %p142 = scmp.ne.s32.totalorder %s134, %s137
      %p143 = scmp.eq.s32.totalorder %s18, 0
      %p144 = por %p142, %p143
      %p145 = scmp.ne.s32.totalorder %s134, %s137
      %p146 = scmp.eq.s32.totalorder %s23, 3
      %p147 = por %p145, %p146
      %p148 = scmp.ne.s32.totalorder %s137, %s138
      %p149 = scmp.eq.s32.totalorder %s23, 0
      %p150 = por %p148, %p149
      %p151 = scmp.ne.s32.totalorder %s137, %s138
      %p152 = scmp.eq.s32.totalorder %s24, 3
      %p153 = por %p151, %p152
      %p155 = scmp.ne.s32.totalorder %s138, %s154
      %p156 = scmp.eq.s32.totalorder %s24, 0
      %p157 = por %p155, %p156
      %s158 = ssub.s32 %s26, %s33
      %p159 = scmp.eq.s32.totalorder %s158, 0
      %s161 = sadd.s32 %s160, 1
      %s162 = scalar_select %p159, %s160, %s161
      %p165 = pneg %p159
      %p166 = scmp.eq.s32.totalorder %s18, 3
      %p167 = por %p165, %p166
      %p168 = scmp.ne.s32.totalorder %s160, %s163
      %p169 = scmp.eq.s32.totalorder %s18, 0
      %p170 = por %p168, %p169
      %p171 = scmp.ne.s32.totalorder %s160, %s163
      %p172 = scmp.eq.s32.totalorder %s23, 3
      %p173 = por %p171, %p172
      %p174 = scmp.ne.s32.totalorder %s163, %s164
      %p175 = scmp.eq.s32.totalorder %s23, 0
      %p176 = por %p174, %p175
      %p177 = scmp.ne.s32.totalorder %s163, %s164
      %p178 = scmp.eq.s32.totalorder %s24, 3
      %p179 = por %p177, %p178
      %p181 = scmp.ne.s32.totalorder %s164, %s180
      %p182 = scmp.eq.s32.totalorder %s24, 0
      %p183 = por %p181, %p182
      %s184 = ssub.s32 %s26, %s33
      %p185 = scmp.eq.s32.totalorder %s184, 0
      %s187 = sadd.s32 %s186, 1
      %s188 = scalar_select %p185, %s186, %s187
      %p191 = pneg %p185
      %p192 = scmp.eq.s32.totalorder %s18, 3
      %p193 = por %p191, %p192
      %p194 = scmp.ne.s32.totalorder %s186, %s189
      %p195 = scmp.eq.s32.totalorder %s18, 0
      %p196 = por %p194, %p195
      %p197 = scmp.ne.s32.totalorder %s186, %s189
      %p198 = scmp.eq.s32.totalorder %s23, 3
      %p199 = por %p197, %p198
      %p200 = scmp.ne.s32.totalorder %s189, %s190
      %p201 = scmp.eq.s32.totalorder %s23, 0
      %p202 = por %p200, %p201
      %p203 = scmp.ne.s32.totalorder %s189, %s190
      %p204 = scmp.eq.s32.totalorder %s24, 3
      %p205 = por %p203, %p204
      %p207 = scmp.ne.s32.totalorder %s190, %s206
      %p208 = scmp.eq.s32.totalorder %s24, 0
      %p209 = por %p207, %p208
      %s210 = ssub.s32 %s25, %s37
      %p211 = scmp.eq.s32.totalorder %s210, 0
      %s213 = sadd.s32 %s212, 1
      %s214 = scalar_select %p211, %s212, %s213
      %p217 = pneg %p211
      %p218 = scmp.eq.s32.totalorder %s18, 3
      %p219 = por %p217, %p218
      %p220 = scmp.ne.s32.totalorder %s212, %s215
      %p221 = scmp.eq.s32.totalorder %s18, 0
      %p222 = por %p220, %p221
      %p223 = scmp.ne.s32.totalorder %s212, %s215
      %p224 = scmp.eq.s32.totalorder %s23, 3
      %p225 = por %p223, %p224
      %p226 = scmp.ne.s32.totalorder %s215, %s216
      %p227 = scmp.eq.s32.totalorder %s23, 0
      %p228 = por %p226, %p227
      %p229 = scmp.ne.s32.totalorder %s215, %s216
      %p230 = scmp.eq.s32.totalorder %s24, 3
      %p231 = por %p229, %p230
      %p233 = scmp.ne.s32.totalorder %s216, %s232
      %p234 = scmp.eq.s32.totalorder %s24, 0
      %p235 = por %p233, %p234
      %s236 = ssub.s32 %s26, %s33
      %s237 = ssub.s32 %s25, %s37
      %s238 = sor.u32 %s236, %s237
      %p239 = scmp.eq.s32.totalorder %s238, 0
      %s241 = sadd.s32 %s240, 1
      %s242 = scalar_select %p239, %s240, %s241
      %p245 = pneg %p239
      %p246 = scmp.eq.s32.totalorder %s18, 3
      %p247 = por %p245, %p246
      %p248 = scmp.ne.s32.totalorder %s240, %s243
      %p249 = scmp.eq.s32.totalorder %s18, 0
      %p250 = por %p248, %p249
      %p251 = scmp.ne.s32.totalorder %s240, %s243
      %p252 = scmp.eq.s32.totalorder %s23, 3
      %p253 = por %p251, %p252
      %p254 = scmp.ne.s32.totalorder %s243, %s244
      %p255 = scmp.eq.s32.totalorder %s23, 0
      %p256 = por %p254, %p255
      %p257 = scmp.ne.s32.totalorder %s243, %s244
      %p258 = scmp.eq.s32.totalorder %s24, 3
      %p259 = por %p257, %p258
      %p261 = scmp.ne.s32.totalorder %s244, %s260
      %p262 = scmp.eq.s32.totalorder %s24, 0
      %p263 = por %p261, %p262
      %p264 = scmp.le.s32.totalorder 1, %s18
      %p265 = scmp.lt.s32.totalorder %s18, 5
      %p266 = pnand %p264, %p265
      %p267 = pneg %p266
      // Predicated region
      $region9: #{tpu_custom_call.1} parent=5 // pred_check
        _
      $region10: #{tpu_custom_call.1} parent=5 // pred_check_branch
        %269 = sbr.rel (%p266) target = $region12
      $region11: #{tpu_custom_call.1} parent=5 // pred_region
        %s270 = ssub.s32 %s18, 1
        // Predicated region
        $region13: #{tpu_custom_call.1} parent=11 // pred_check
          %p271 = pneg %p77
        $region14: #{tpu_custom_call.1} parent=11 // pred_check_branch
          %273 = sbr.rel (%p271) target = $region16
        $region15: #{tpu_custom_call.1} parent=11 // pred_region
          _
        $region16: #{tpu_custom_call.1} parent=11 // pred_fallthru
          _
        // Predicated region
        $region17: #{tpu_custom_call.1} parent=11 // pred_check
          %p274 = pneg %p98
        $region18: #{tpu_custom_call.1} parent=11 // pred_check_branch
          %276 = sbr.rel (%p274) target = $region20
        $region19: #{tpu_custom_call.1} parent=11 // pred_region
          _
        $region20: #{tpu_custom_call.1} parent=11 // pred_fallthru
          _
      $region12: #{tpu_custom_call.1} parent=5 // pred_fallthru
        _
      %p277 = scmp.lt.s32.totalorder %s18, 4
      // Predicated region
      $region21: #{tpu_custom_call.1} parent=5 // pred_check
        %p278 = pneg %p277
      $region22: #{tpu_custom_call.1} parent=5 // pred_check_branch
        %280 = sbr.rel (%p278) target = $region24
      $region23: #{tpu_custom_call.1} parent=5 // pred_region
        // Predicated region
        $region25: #{tpu_custom_call.1} parent=23 // pred_check
          %p281 = pneg %p50
        $region26: #{tpu_custom_call.1} parent=23 // pred_check_branch
          %283 = sbr.rel (%p281) target = $region28
        $region27: #{tpu_custom_call.1} parent=23 // pred_region
          %p284 = scmp.lt.s32.totalorder %s25, 1
          %s285 = scalar_select %p284, %s25, 1
          %s286 = smul.addr %s285, 2
          %s287 = smul.addr %s286, 4
          %s288 = scalar_lea.vmem %s0, %s287
        $region28: #{tpu_custom_call.1} parent=23 // pred_fallthru
          _
        // Predicated region
        $region29: #{tpu_custom_call.1} parent=23 // pred_check
          %p289 = pneg %p118
        $region30: #{tpu_custom_call.1} parent=23 // pred_check_branch
          %291 = sbr.rel (%p289) target = $region32
        $region31: #{tpu_custom_call.1} parent=23 // pred_region
          %p292 = scmp.lt.s32.totalorder %s26, 1
          %s293 = scalar_select %p292, %s26, 1
          %s294 = smul.addr %s293, 20
          %s295 = smul.addr %s294, 4
          %s296 = scalar_lea.vmem %s3, %s295
        $region32: #{tpu_custom_call.1} parent=23 // pred_fallthru
          _
        // Predicated region
        $region33: #{tpu_custom_call.1} parent=23 // pred_check
          %p297 = pneg %p144
        $region34: #{tpu_custom_call.1} parent=23 // pred_check_branch
          %299 = sbr.rel (%p297) target = $region36
        $region35: #{tpu_custom_call.1} parent=23 // pred_region
          %p300 = scmp.lt.s32.totalorder %s26, 1
          %s301 = scalar_select %p300, %s26, 1
          %s302 = smul.addr %s301, 12
          %s303 = smul.addr %s302, 4
          %s304 = scalar_lea.vmem %s4, %s303
        $region36: #{tpu_custom_call.1} parent=23 // pred_fallthru
          _
        // Predicated region
        $region37: #{tpu_custom_call.1} parent=23 // pred_check
          %p305 = pneg %p170
        $region38: #{tpu_custom_call.1} parent=23 // pred_check_branch
          %307 = sbr.rel (%p305) target = $region40
        $region39: #{tpu_custom_call.1} parent=23 // pred_region
          %p308 = scmp.lt.s32.totalorder %s26, 1
          %s309 = scalar_select %p308, %s26, 1
          %s310 = smul.addr %s309, 16
          %s311 = smul.addr %s310, 4
          %s312 = scalar_lea.vmem %s5, %s311
        $region40: #{tpu_custom_call.1} parent=23 // pred_fallthru
          _
        // Predicated region
        $region41: #{tpu_custom_call.1} parent=23 // pred_check
          %p313 = pneg %p196
        $region42: #{tpu_custom_call.1} parent=23 // pred_check_branch
          %315 = sbr.rel (%p313) target = $region44
        $region43: #{tpu_custom_call.1} parent=23 // pred_region
          %p316 = scmp.lt.s32.totalorder %s26, 1
          %s317 = scalar_select %p316, %s26, 1
          %s318 = smul.addr %s317, 2
          %s319 = smul.addr %s318, 8
          %s320 = scalar_lea.vmem %s6, %s319
        $region44: #{tpu_custom_call.1} parent=23 // pred_fallthru
          _
      $region24: #{tpu_custom_call.1} parent=5 // pred_fallthru
        _
      %p321 = scmp.le.s32.totalorder 1, %s18
      %p322 = scmp.lt.s32.totalorder %s18, 5
      %p323 = pnand %p321, %p322
      %p324 = pneg %p323
      // Predicated region
      $region45: #{tpu_custom_call.1} parent=5 // pred_check
        _
      $region46: #{tpu_custom_call.1} parent=5 // pred_check_branch
        %326 = sbr.rel (%p323) target = $region48
      $region47: #{tpu_custom_call.1} parent=5 // pred_region
        %s327 = ssub.s32 %s18, 1
        %p328 = scmp.lt.s32.totalorder %s27, 1
        %s329 = scalar_select %p328, %s27, 1
        %s330 = smul.addr %s329, 2
        %s331 = smul.addr %s330, 4
        %s332 = scalar_lea.vmem %s0, %s331
        %p333 = pneg %p56
        %p334 = pneg %p53
        %p335 = pneg %p77
        %p336 = pneg %p74
        %p337 = pneg %p98
        %p338 = pneg %p95
        %p339 = scmp.lt.s32.totalorder %s28, 1
        %s340 = scalar_select %p339, %s28, 1
        %s341 = smul.addr %s340, 20
        %s342 = smul.addr %s341, 4
        %s343 = scalar_lea.vmem %s3, %s342
        %p344 = pneg %p124
        %p345 = pneg %p121
        %p346 = scmp.lt.s32.totalorder %s28, 1
        %s347 = scalar_select %p346, %s28, 1
        %s348 = smul.addr %s347, 12
        %s349 = smul.addr %s348, 4
        %s350 = scalar_lea.vmem %s4, %s349
        %p351 = pneg %p150
        %p352 = pneg %p147
        %p353 = scmp.lt.s32.totalorder %s28, 1
        %s354 = scalar_select %p353, %s28, 1
        %s355 = smul.addr %s354, 16
        %s356 = smul.addr %s355, 4
        %s357 = scalar_lea.vmem %s5, %s356
        %p358 = pneg %p176
        %p359 = pneg %p173
        %p360 = scmp.lt.s32.totalorder %s28, 1
        %s361 = scalar_select %p360, %s28, 1
        %s362 = smul.addr %s361, 2
        %s363 = smul.addr %s362, 8
        %s364 = scalar_lea.vmem %s6, %s363
        %p365 = pneg %p202
        %p366 = pneg %p199
        %p367 = pneg %p228
        %p368 = pneg %p225
        %s369 = sand.u32 %s215, 1
        %s370 = scalar_lea.sflag [#allocation3], %s369
        %s371 = sand.u32 %s215, 1
        %s372 = smul.addr %s371, 16
        %s373 = scalar_lea.vmem [#allocation2], %s372
        %p374 = pneg %p256
        %p375 = pneg %p253
        %p376 = scmp.lt.s32.totalorder %s28, 1
        %s377 = scalar_select %p376, %s28, 1
        %p378 = scmp.lt.s32.totalorder %s27, 1
        %s379 = scalar_select %p378, %s27, 1
        %s380 = smul.addr %s379, 2
        %s381 = smul.addr %s377, 4
        %s382 = sadd.s32 %s380, %s381
        %s383 = smul.addr %s382, 8
        %s384 = scalar_lea.vmem %s8, %s383
        %p385 = scmp.lt.s32.totalorder %s27, 1
        %s386 = scalar_select %p385, %s27, 1
        %s387 = smul.addr %s386, 2
        %s388 = smul.addr %s387, 4
        %s389 = scalar_lea.vmem %s0, %s388
        %p390 = scmp.lt.s32.totalorder %s28, 1
        %s391 = scalar_select %p390, %s28, 1
        %s392 = smul.addr %s391, 20
        %s393 = smul.addr %s392, 4
        %s394 = scalar_lea.vmem %s3, %s393
        %p395 = scmp.lt.s32.totalorder %s28, 1
        %s396 = scalar_select %p395, %s28, 1
        %s397 = smul.addr %s396, 12
        %s398 = smul.addr %s397, 4
        %s399 = scalar_lea.vmem %s4, %s398
        %p400 = scmp.lt.s32.totalorder %s28, 1
        %s401 = scalar_select %p400, %s28, 1
        %s402 = smul.addr %s401, 16
        %s403 = smul.addr %s402, 4
        %s404 = scalar_lea.vmem %s5, %s403
        %p405 = scmp.lt.s32.totalorder %s28, 1
        %s406 = scalar_select %p405, %s28, 1
        %s407 = smul.addr %s406, 2
        %s408 = smul.addr %s407, 8
        %s409 = scalar_lea.vmem %s6, %s408
        %p410 = scmp.lt.s32.totalorder %s28, 1
        %s411 = scalar_select %p410, %s28, 1
        %p412 = scmp.lt.s32.totalorder %s27, 1
        %s413 = scalar_select %p412, %s27, 1
        %s414 = smul.addr %s413, 2
        %s415 = smul.addr %s411, 4
        %s416 = sadd.s32 %s414, %s415
        %s417 = smul.addr %s416, 8
        %s418 = scalar_lea.vmem %s8, %s417
        %p420 = scmp.eq.s32.totalorder %s28, 0
        // Predicated region
        $region49: #{tpu_custom_call.1} parent=47 // pred_check
          %p421 = pneg %p420
        $region50: #{tpu_custom_call.1} parent=47 // pred_check_branch
          %423 = sbr.rel (%p421) target = $region52
        $region51: #{tpu_custom_call.1} parent=47 // pred_region
          %v424 = vld [vmem:[%s389] sm:$0xf]
          %v425 = vld [vmem:[%s389 + $0x4] sm:$0xf]
          %v426 = vld [vmem:[%s1] sm:$0xf]
          %v427 = vld [vmem:[%s1 + $0x4] sm:$0xf]
          %v428 = vld [vmem:[%s1 + $0x8] sm:$0xf]
          %v429 = vld [vmem:[%s1 + $0xc] sm:$0xf]
          %v430 = vld [vmem:[%s1 + $0x10] sm:$0xf]
          %v431 = vld [vmem:[%s1 + $0x14] sm:$0xf]
          %v432 = vld [vmem:[%s2] sm:$0x1]
          %v434 = vperm.slane %v432, 0
          %v438 = vunpack.c.l.b16 %v424
          %v439 = vunpack.c.l.b16 %v425
          %v440 = vpack.c.b16 %v439, %v438
          %v447 = vunpack.c.l.b16 %v426
          %v448 = vunpack.c.l.b16 %v427
          %v449 = vunpack.c.l.b16 %v428
          %v450 = vunpack.c.l.b16 %v429
          %v451 = vunpack.c.l.b16 %v430
          %v452 = vunpack.c.l.b16 %v431
          %v453 = vpack.c.b16 %v448, %v447
          %v454 = vpack.c.b16 %v450, %v449
          %v455 = vpack.c.b16 %v452, %v451
          %vm459 = vcmask 392192
          %v461 = vsel %vm459, %v440, 0
          %463 = vmatpush.bf16.msra.mxu0 0
          %464 = vmatpush.bf16.msra.mxu0 0
          %465 = vmatpush.bf16.msra.mxu0 0
          %466 = vmatpush.bf16.msra.mxu0 0
          %467 = vmatpush.bf16.msra.mxu0 0
          %468 = vmatpush.bf16.msra.mxu0 %v455
          %469 = vmatpush.bf16.msra.mxu0 %v454
          %470 = vmatpush.bf16.msra.mxu0 %v453
          %471 = vmatmul.bf16.gmra.mxu0 %v461
          %v472 = vpop.f32.mrf.mxu0
          %v473 = vadd.f32 %v434, %v472
          %v474 = vpop.f32.mrf.mxu0
          %v475 = vadd.f32 %v434, %v474
          %476 = vdwg.mxu0
          %vm477 = vcmask 261120
          %478 = vst.msk [vmem:[%s373] sm:$0xff] %vm477, %v473
          %479 = vst.msk [vmem:[%s373 + $0x8] sm:$0xff] %vm477, %v475
        $region52: #{tpu_custom_call.1} parent=47 // pred_fallthru
          _
        %v480 = vld [vmem:[%s373] sm:$0xff]
        %v481 = vld [vmem:[%s373 + $0x8] sm:$0xff]
        %v482 = vld [vmem:[%s409] sm:$0x1]
        %v483 = vld [vmem:[%s409 + $0x1] sm:$0x1]
        %vm484 = vcmask 261120
        %v485 = vsel %vm484, %v480, 0.0
        %486 = vadd.xlane.f32.xlu0 %v485
        %v487 = vpop.xlane.xlu0 %486
        %v488 = vsel %vm484, %v481, 0.0
        %489 = vadd.xlane.f32.xlu0 %v488
        %v490 = vpop.xlane.xlu0 %489
        %v491 = vrcp.pop 32.0
        %v492 = vmul.f32 32.0, %v491
        %v493 = vsub.f32 1.0, %v492
        %v494 = vmul.f32 %v491, %v493
        %v495 = vadd.f32 %v491, %v494
        %vm496 = vweird.f32 %v491
        %v497 = vsel %vm496, %v491, %v495
        %v498 = vmul.f32 %v487, %v497
        %v499 = vmul.f32 %v490, %v497
        %v500 = vsub.f32 %v480, %v498
        %v501 = vsub.f32 %v481, %v499
        %v502 = vmul.f32 %v500, %v500
        %v503 = vmul.f32 %v501, %v501
        %v504 = vsel %vm484, %v502, 0.0
        %505 = vadd.xlane.f32.xlu0 %v504
        %v506 = vpop.xlane.xlu0 %505
        %v507 = vsel %vm484, %v503, 0.0
        %508 = vadd.xlane.f32.xlu0 %v507
        %v509 = vpop.xlane.xlu0 %508
        %v510 = vmul.f32 %v506, %v497
        %v511 = vmul.f32 %v509, %v497
        %v512 = vadd.f32 %v510, 1e-05
        %v513 = vadd.f32 %v511, 1e-05
        %v514 = vrsqrt.pop %v512
        %v515 = vmul.f32 %v514, %v512
        %v516 = vmul.f32 %v515, %v514
        %v517 = vmul.f32 0.5, %v516
        %v518 = vsub.f32 1.5, %v517
        %v519 = vmul.f32 %v514, %v518
        %vm520 = vweird.f32 %v512
        %vm521 = vweird.f32 %v514
        %vm522 = vmor %vm520, %vm521
        %v523 = vsel %vm522, %v514, %v519
        %v524 = vrsqrt.pop %v513
        %v525 = vmul.f32 %v524, %v513
        %v526 = vmul.f32 %v525, %v524
        %v527 = vmul.f32 0.5, %v526
        %v528 = vsub.f32 1.5, %v527
        %v529 = vmul.f32 %v524, %v528
        %vm530 = vweird.f32 %v513
        %vm531 = vweird.f32 %v524
        %vm532 = vmor %vm530, %vm531
        %v533 = vsel %vm532, %v524, %v529
        %v534 = vmul.f32 %v500, %v523
        %v535 = vmul.f32 %v501, %v533
        %v536 = vperm.slane %v482, 0
        %v537 = vmul.f32 %v534, %v536
        %v538 = vmul.f32 %v535, %v536
        %v539 = vperm.slane %v483, 0
        %v540 = vadd.f32 %v537, %v539
        %v541 = vadd.f32 %v538, %v539
        %v542 = vpack.c.bf16 %v541, %v540
        %v543 = vld [vmem:[%s394] sm:$0xf]
        %v544 = vld [vmem:[%s394 + $0x14] sm:$0xf]
        %v545 = vld [vmem:[%s394 + $0x28] sm:$0xf]
        %v546 = vld [vmem:[%s394 + $0x3c] sm:$0xf]
        %v551 = vunpack.c.l.b16 %v543
        %v552 = vunpack.c.l.b16 %v544
        %v553 = vunpack.c.l.b16 %v545
        %v554 = vunpack.c.l.b16 %v546
        %v555 = vpack.c.b16 %v552, %v551
        %v556 = vpack.c.b16 %v554, %v553
        %v560 = vsel %vm484, %v542, 0
        %562 = vmatpush.bf16.msra.mxu0 0
        %563 = vmatpush.bf16.msra.mxu0 0
        %564 = vmatpush.bf16.msra.mxu0 0
        %565 = vmatpush.bf16.msra.mxu0 0
        %566 = vmatpush.bf16.msra.mxu0 0
        %567 = vmatpush.bf16.msra.mxu0 0
        %568 = vmatpush.bf16.msra.mxu0 %v556
        %569 = vmatpush.bf16.msra.mxu0 %v555
        %570 = vmatmul.bf16.gmra.mxu0 %v560
        %v571 = vpop.f32.mrf.mxu0
        %v572 = vadd.f32 0.0, %v571
        %v573 = vpop.f32.mrf.mxu0
        %v574 = vadd.f32 0.0, %v573
        %575 = vdwg.mxu0
        %v576 = vmul.f32 %v572, 0.25
        %v577 = vmul.f32 %v574, 0.25
        %v578 = vpack.c.bf16 %v576, %v576
        %v579 = vpack.c.bf16 %v577, %v577
        %v580 = vpack.c.bf16 %v572, %v572
        %v581 = vpack.c.bf16 %v574, %v574
        %v584 = vunpack.c.l.b16 %v578
        %v585 = vunpack.c.l.b16 %v579
        %v586 = vpack.c.b16 %v585, %v584
        %v589 = vunpack.c.l.b16 %v580
        %v590 = vunpack.c.l.b16 %v581
        %v591 = vpack.c.b16 %v590, %v589
        %592 = vrot.lane.b32.xlu0 %v591, 96
        %v593 = vpop.permute.xlu0 %592
        %vm594 = vcmask 130048
        %v596 = vsel %vm594, %v586, 0
        %v599 = vsel %vm594, %v593, 0
        %601 = vmatpush.bf16.xpose.msra.mxu0 0
        %602 = vmatpush.bf16.xpose.msra.mxu0 0
        %603 = vmatpush.bf16.xpose.msra.mxu0 0
        %604 = vmatpush.bf16.xpose.msra.mxu0 0
        %605 = vmatpush.bf16.xpose.msra.mxu0 0
        %606 = vmatpush.bf16.xpose.msra.mxu0 0
        %607 = vmatpush.bf16.xpose.msra.mxu0 0
        %608 = vmatpush.bf16.xpose.msra.mxu0 %v599
        %609 = vmatmul.bf16.gmra.mxu0 %v596
        %v610 = vpop.f32.mrf.mxu0
        %v611 = vadd.f32 0.0, %v610
        %v612 = vpop.f32.mrf.mxu0
        %v613 = vadd.f32 0.0, %v612
        %614 = vdwg.mxu0
        %v615 = vsel %vm594, %v611, -inf
        %616 = vmax.xlane.f32.xlu0 %v615
        %v617 = vpop.xlane.xlu0 %616
        %v618 = vsel %vm594, %v613, -inf
        %619 = vmax.xlane.f32.xlu0 %v618
        %v620 = vpop.xlane.xlu0 %619
        %v621 = vsub.f32 %v611, %v617
        %v622 = vsub.f32 %v613, %v620
        %v623 = vmul.f32 %v621, 1.442695
        %v624 = vpow.pop %v623
        %v625 = vmul.f32 %v622, 1.442695
        %v626 = vpow.pop %v625
        %v627 = vsel %vm594, %v624, 0.0
        %628 = vadd.xlane.f32.xlu0 %v627
        %v629 = vpop.xlane.xlu0 %628
        %v630 = vsel %vm594, %v626, 0.0
        %631 = vadd.xlane.f32.xlu0 %v630
        %v632 = vpop.xlane.xlu0 %631
        %v633 = vrcp.pop %v629
        %v634 = vrcp.pop %v632
        %v635 = vmul.f32 %v624, %v633
        %v636 = vmul.f32 %v626, %v634
        %v637 = vpack.c.bf16 %v635, %v635
        %v638 = vpack.c.bf16 %v636, %v636
        %v641 = vunpack.c.l.b16 %v637
        %v642 = vunpack.c.l.b16 %v638
        %v643 = vpack.c.b16 %v642, %v641
        %644 = vrot.lane.b32.xlu0 %v591, 64
        %v645 = vpop.permute.xlu0 %644
        %v648 = vsel %vm594, %v643, 0
        %650 = vmatpush.bf16.msra.mxu0 0
        %651 = vmatpush.bf16.msra.mxu0 0
        %652 = vmatpush.bf16.msra.mxu0 0
        %653 = vmatpush.bf16.msra.mxu0 0
        %654 = vmatpush.bf16.msra.mxu0 0
        %655 = vmatpush.bf16.msra.mxu0 0
        %656 = vmatpush.bf16.msra.mxu0 0
        %657 = vmatpush.bf16.msra.mxu0 %v645
        %658 = vmatmul.bf16.gmra.mxu0 %v648
        %v659 = vpop.f32.mrf.mxu0
        %v660 = vadd.f32 0.0, %v659
        %v661 = vpop.f32.mrf.mxu0
        %v662 = vadd.f32 0.0, %v661
        %663 = vdwg.mxu0
        %v664 = vpack.c.bf16 %v662, %v660
        %v665 = vld [vmem:[%s399] sm:$0xf]
        %v666 = vld [vmem:[%s399 + $0x4] sm:$0xf]
        %667 = vrot.lane.b32.xlu0 %v586, 112
        %v668 = vpop.permute.xlu0 %667
        %669 = vrot.lane.b32.xlu0 %v591, 80
        %v670 = vpop.permute.xlu0 %669
        %v672 = vsel %vm594, %v668, 0
        %v675 = vsel %vm594, %v670, 0
        %677 = vmatpush.bf16.xpose.msra.mxu0 0
        %678 = vmatpush.bf16.xpose.msra.mxu0 0
        %679 = vmatpush.bf16.xpose.msra.mxu0 0
        %680 = vmatpush.bf16.xpose.msra.mxu0 0
        %681 = vmatpush.bf16.xpose.msra.mxu0 0
        %682 = vmatpush.bf16.xpose.msra.mxu0 0
        %683 = vmatpush.bf16.xpose.msra.mxu0 0
        %684 = vmatpush.bf16.xpose.msra.mxu0 %v675
        %685 = vmatmul.bf16.gmra.mxu0 %v672
        %v686 = vpop.f32.mrf.mxu0
        %v687 = vadd.f32 0.0, %v686
        %v688 = vpop.f32.mrf.mxu0
        %v689 = vadd.f32 0.0, %v688
        %690 = vdwg.mxu0
        %v691 = vsel %vm594, %v687, -inf
        %692 = vmax.xlane.f32.xlu0 %v691
        %v693 = vpop.xlane.xlu0 %692
        %v694 = vsel %vm594, %v689, -inf
        %695 = vmax.xlane.f32.xlu0 %v694
        %v696 = vpop.xlane.xlu0 %695
        %v697 = vsub.f32 %v687, %v693
        %v698 = vsub.f32 %v689, %v696
        %v699 = vmul.f32 %v697, 1.442695
        %v700 = vpow.pop %v699
        %v701 = vmul.f32 %v698, 1.442695
        %v702 = vpow.pop %v701
        %v703 = vsel %vm594, %v700, 0.0
        %704 = vadd.xlane.f32.xlu0 %v703
        %v705 = vpop.xlane.xlu0 %704
        %v706 = vsel %vm594, %v702, 0.0
        %707 = vadd.xlane.f32.xlu0 %v706
        %v708 = vpop.xlane.xlu0 %707
        %v709 = vrcp.pop %v705
        %v710 = vrcp.pop %v708
        %v711 = vmul.f32 %v700, %v709
        %v712 = vmul.f32 %v702, %v710
        %v713 = vpack.c.bf16 %v711, %v711
        %v714 = vpack.c.bf16 %v712, %v712
        %v717 = vunpack.c.l.b16 %v713
        %v718 = vunpack.c.l.b16 %v714
        %v719 = vpack.c.b16 %v718, %v717
        %720 = vrot.lane.b32.xlu0 %v591, 48
        %v721 = vpop.permute.xlu0 %720
        %v724 = vsel %vm594, %v719, 0
        %726 = vmatpush.bf16.msra.mxu0 0
        %727 = vmatpush.bf16.msra.mxu0 0
        %728 = vmatpush.bf16.msra.mxu0 0
        %729 = vmatpush.bf16.msra.mxu0 0
        %730 = vmatpush.bf16.msra.mxu0 0
        %731 = vmatpush.bf16.msra.mxu0 0
        %732 = vmatpush.bf16.msra.mxu0 0
        %733 = vmatpush.bf16.msra.mxu0 %v721
        %734 = vmatmul.bf16.gmra.mxu0 %v724
        %v735 = vpop.f32.mrf.mxu0
        %v736 = vadd.f32 0.0, %v735
        %v737 = vpop.f32.mrf.mxu0
        %v738 = vadd.f32 0.0, %v737
        %739 = vdwg.mxu0
        %v740 = vpack.c.bf16 %v738, %v736
        %v741 = vld [vmem:[%s399 + $0x8] sm:$0xf]
        %v742 = vld [vmem:[%s399 + $0xc] sm:$0xf]
        %v745 = vunpack.c.l.b16 %v741
        %v746 = vunpack.c.l.b16 %v742
        %v747 = vpack.c.b16 %v746, %v745
        %v750 = vsel %vm594, %v740, 0
        %752 = vmatpush.bf16.msra.mxu0 0
        %753 = vmatpush.bf16.msra.mxu0 0
        %754 = vmatpush.bf16.msra.mxu0 0
        %755 = vmatpush.bf16.msra.mxu0 0
        %756 = vmatpush.bf16.msra.mxu0 0
        %757 = vmatpush.bf16.msra.mxu0 0
        %758 = vmatpush.bf16.msra.mxu0 0
        %759 = vmatpush.bf16.msra.mxu0 %v747
        %760 = vmatmul.bf16.gmra.mxu0 %v750
        %v761 = vpop.f32.mrf.mxu0
        %v762 = vadd.f32 0.0, %v761
        %v763 = vpop.f32.mrf.mxu0
        %v764 = vadd.f32 0.0, %v763
        %765 = vdwg.mxu0
        %v768 = vunpack.c.l.b16 %v665
        %v769 = vunpack.c.l.b16 %v666
        %v770 = vpack.c.b16 %v769, %v768
        %v773 = vsel %vm594, %v664, 0
        %775 = vmatpush.bf16.msra.mxu0 0
        %776 = vmatpush.bf16.msra.mxu0 0
        %777 = vmatpush.bf16.msra.mxu0 0
        %778 = vmatpush.bf16.msra.mxu0 0
        %779 = vmatpush.bf16.msra.mxu0 0
        %780 = vmatpush.bf16.msra.mxu0 0
        %781 = vmatpush.bf16.msra.mxu0 0
        %782 = vmatpush.bf16.msra.mxu0 %v770
        %783 = vmatmul.bf16.gmra.mxu0 %v773
        %v784 = vpop.f32.mrf.mxu0
        %v785 = vadd.f32 %v762, %v784
        %v786 = vpop.f32.mrf.mxu0
        %v787 = vadd.f32 %v764, %v786
        %788 = vdwg.mxu0
        %v789 = vadd.f32 %v480, %v785
        %v790 = vadd.f32 %v481, %v787
        %v791 = vld [vmem:[%s409 + $0x2] sm:$0x1]
        %v792 = vperm.slane %v791, 0
        %v793 = vadd.f32 %v789, %v792
        %v794 = vadd.f32 %v790, %v792
        %v795 = vpack.c.bf16 %v794, %v793
        %v796 = vld [vmem:[%s394] sm:$0xff]
        %v797 = vld [vmem:[%s394 + $0x14] sm:$0xff]
        %v798 = vld [vmem:[%s394 + $0x28] sm:$0xff]
        %v799 = vld [vmem:[%s394 + $0x3c] sm:$0xff]
        %v800 = vld [vmem:[%s409 + $0x3] sm:$0x1]
        %v801 = vperm.slane %v800, 0
        %v806 = vunpack.c.l.b16 %v796
        %v807 = vunpack.c.h.b16 %v796
        %v808 = vunpack.c.l.b16 %v797
        %v809 = vunpack.c.h.b16 %v797
        %v810 = vunpack.c.l.b16 %v798
        %v811 = vunpack.c.h.b16 %v798
        %v812 = vunpack.c.l.b16 %v799
        %v813 = vunpack.c.h.b16 %v799
        %v814 = vpack.c.b16 %v808, %v806
        %v815 = vpack.c.b16 %v809, %v807
        %v816 = vpack.c.b16 %v812, %v810
        %v817 = vpack.c.b16 %v813, %v811
        %818 = vrot.lane.b32.xlu0 %v814, 32
        %v819 = vpop.permute.xlu0 %818
        %820 = vrot.lane.b32.xlu0 %v815, 32
        %v821 = vpop.permute.xlu0 %820
        %822 = vrot.lane.b32.xlu0 %v816, 32
        %v823 = vpop.permute.xlu0 %822
        %824 = vrot.lane.b32.xlu0 %v817, 32
        %v825 = vpop.permute.xlu0 %824
        %vm826 = vcmask 261120
        %v827 = vsel %vm826, %v819, %v821
        %v828 = vsel %vm826, %v823, %v825
        %v832 = vsel %vm484, %v795, 0
        %834 = vmatpush.bf16.msra.mxu0 0
        %835 = vmatpush.bf16.msra.mxu0 0
        %836 = vmatpush.bf16.msra.mxu0 0
        %837 = vmatpush.bf16.msra.mxu0 0
        %838 = vmatpush.bf16.msra.mxu0 0
        %839 = vmatpush.bf16.msra.mxu0 0
        %840 = vmatpush.bf16.msra.mxu0 %v828
        %841 = vmatpush.bf16.msra.mxu0 %v827
        %842 = vmatmul.bf16.gmra.mxu0 %v832
        %v843 = vpop.f32.mrf.mxu0
        %v844 = vadd.f32 %v801, %v843
        %v845 = vpop.f32.mrf.mxu0
        %v846 = vadd.f32 %v801, %v845
        %847 = vdwg.mxu0
        %848 = vmax.xlane.f32.xlu0 %v844
        %v849 = vpop.xlane.xlu0 %848
        %850 = vmax.xlane.f32.xlu0 %v846
        %v851 = vpop.xlane.xlu0 %850
        %vm852 = vcmp.ge.f32.partialorder %v844, %v849
        %vm853 = vcmp.ge.f32.partialorder %v846, %v851
        %v854 = vsel %vm852, -1e+30, %v844
        %v855 = vsel %vm853, -1e+30, %v846
        %856 = vmax.xlane.f32.xlu0 %v854
        %v857 = vpop.xlane.xlu0 %856
        %858 = vmax.xlane.f32.xlu0 %v855
        %v859 = vpop.xlane.xlu0 %858
        %vm860 = vcmp.ge.f32.partialorder %v844, %v857
        %vm861 = vcmp.ge.f32.partialorder %v846, %v859
        %v862 = vsel %vm860, %v844, -1e+30
        %v863 = vsel %vm861, %v846, -1e+30
        %864 = vmax.xlane.f32.xlu0 %v862
        %v865 = vpop.xlane.xlu0 %864
        %866 = vmax.xlane.f32.xlu0 %v863
        %v867 = vpop.xlane.xlu0 %866
        %v868 = vsub.f32 %v862, %v865
        %v869 = vsub.f32 %v863, %v867
        %v870 = vmul.f32 %v868, 1.442695
        %v871 = vpow.pop %v870
        %v872 = vmul.f32 %v869, 1.442695
        %v873 = vpow.pop %v872
        %874 = vadd.xlane.f32.xlu0 %v871
        %v875 = vpop.xlane.xlu0 %874
        %876 = vadd.xlane.f32.xlu0 %v873
        %v877 = vpop.xlane.xlu0 %876
        %v878 = vrcp.pop %v875
        %v879 = vmul.f32 %v875, %v878
        %v880 = vsub.f32 1.0, %v879
        %v881 = vmul.f32 %v878, %v880
        %v882 = vadd.f32 %v878, %v881
        %vm883 = vweird.f32 %v875
        %vm884 = vweird.f32 %v878
        %vm885 = vmor %vm883, %vm884
        %v886 = vsel %vm885, %v878, %v882
        %v887 = vand.u32 2147483647, %v875
        %vm888 = vcmp.eq.f32.partialorder %v887, 8.507059e+37
        %v889 = vand.u32 %v875, 2147483648
        %v890 = vor.u32 1.1754944e-38, %v889
        %v891 = vsel %vm888, %v890, %v886
        %v892 = vmul.f32 %v871, %v891
        %v893 = vrcp.pop %v877
        %v894 = vmul.f32 %v877, %v893
        %v895 = vsub.f32 1.0, %v894
        %v896 = vmul.f32 %v893, %v895
        %v897 = vadd.f32 %v893, %v896
        %vm898 = vweird.f32 %v877
        %vm899 = vweird.f32 %v893
        %vm900 = vmor %vm898, %vm899
        %v901 = vsel %vm900, %v893, %v897
        %v902 = vand.u32 2147483647, %v877
        %vm903 = vcmp.eq.f32.partialorder %v902, 8.507059e+37
        %v904 = vand.u32 %v877, 2147483648
        %v905 = vor.u32 1.1754944e-38, %v904
        %v906 = vsel %vm903, %v905, %v901
        %v907 = vmul.f32 %v873, %v906
        %vm908 = vcmask 31744
        %909 = vst.msk [vmem:[%s418] sm:$0xff] %vm908, %v892
        %910 = vst.msk [vmem:[%s418 + $0x8] sm:$0xff] %vm908, %v907
        %v911 = vld [vmem:[%s409 + $0x4] sm:$0x1]
        %v912 = vld [vmem:[%s409 + $0x5] sm:$0x1]
        %v913 = vsel %vm484, %v793, 0.0
        %914 = vadd.xlane.f32.xlu0 %v913
        %v915 = vpop.xlane.xlu0 %914
        %v916 = vsel %vm484, %v794, 0.0
        %917 = vadd.xlane.f32.xlu0 %v916
        %v918 = vpop.xlane.xlu0 %917
        %v919 = vmul.f32 %v915, %v497
        %v920 = vmul.f32 %v918, %v497
        %v921 = vsub.f32 %v793, %v919
        %v922 = vsub.f32 %v794, %v920
        %v923 = vmul.f32 %v921, %v921
        %v924 = vmul.f32 %v922, %v922
        %v925 = vsel %vm484, %v923, 0.0
        %926 = vadd.xlane.f32.xlu0 %v925
        %v927 = vpop.xlane.xlu0 %926
        %v928 = vsel %vm484, %v924, 0.0
        %929 = vadd.xlane.f32.xlu0 %v928
        %v930 = vpop.xlane.xlu0 %929
        %v931 = vmul.f32 %v927, %v497
        %v932 = vmul.f32 %v930, %v497
        %v933 = vadd.f32 %v931, 1e-05
        %v934 = vadd.f32 %v932, 1e-05
        %v935 = vrsqrt.pop %v933
        %v936 = vmul.f32 %v935, %v933
        %v937 = vmul.f32 %v936, %v935
        %v938 = vmul.f32 0.5, %v937
        %v939 = vsub.f32 1.5, %v938
        %v940 = vmul.f32 %v935, %v939
        %vm941 = vweird.f32 %v933
        %vm942 = vweird.f32 %v935
        %vm943 = vmor %vm941, %vm942
        %v944 = vsel %vm943, %v935, %v940
        %v945 = vrsqrt.pop %v934
        %v946 = vmul.f32 %v945, %v934
        %v947 = vmul.f32 %v946, %v945
        %v948 = vmul.f32 0.5, %v947
        %v949 = vsub.f32 1.5, %v948
        %v950 = vmul.f32 %v945, %v949
        %vm951 = vweird.f32 %v934
        %vm952 = vweird.f32 %v945
        %vm953 = vmor %vm951, %vm952
        %v954 = vsel %vm953, %v945, %v950
        %v955 = vmul.f32 %v921, %v944
        %v956 = vmul.f32 %v922, %v954
        %v957 = vperm.slane %v911, 0
        %v958 = vmul.f32 %v955, %v957
        %v959 = vmul.f32 %v956, %v957
        %v960 = vperm.slane %v912, 0
        %v961 = vadd.f32 %v958, %v960
        %v962 = vadd.f32 %v959, %v960
        %v963 = vpack.c.bf16 %v962, %v961
        %v964 = vld [vmem:[%s394 + $0x4] sm:$0xff]
        %v965 = vld [vmem:[%s394 + $0x18] sm:$0xff]
        %v966 = vld [vmem:[%s394 + $0x2c] sm:$0xff]
        %v967 = vld [vmem:[%s394 + $0x40] sm:$0xff]
        %v968 = vld [vmem:[%s409 + $0x6] sm:$0x1]
        %v969 = vperm.slane %v968, 0
        %v974 = vunpack.c.l.b16 %v964
        %v975 = vunpack.c.h.b16 %v964
        %v976 = vunpack.c.l.b16 %v965
        %v977 = vunpack.c.h.b16 %v965
        %v978 = vunpack.c.l.b16 %v966
        %v979 = vunpack.c.h.b16 %v966
        %v980 = vunpack.c.l.b16 %v967
        %v981 = vunpack.c.h.b16 %v967
        %v982 = vpack.c.b16 %v976, %v974
        %v983 = vpack.c.b16 %v977, %v975
        %v984 = vpack.c.b16 %v980, %v978
        %v985 = vpack.c.b16 %v981, %v979
        %986 = vrot.lane.b32.xlu0 %v982, 32
        %v987 = vpop.permute.xlu0 %986
        %988 = vrot.lane.b32.xlu0 %v983, 32
        %v989 = vpop.permute.xlu0 %988
        %990 = vrot.lane.b32.xlu0 %v984, 32
        %v991 = vpop.permute.xlu0 %990
        %992 = vrot.lane.b32.xlu0 %v985, 32
        %v993 = vpop.permute.xlu0 %992
        %v994 = vsel %vm826, %v987, %v989
        %v995 = vsel %vm826, %v991, %v993
        %v999 = vsel %vm484, %v963, 0
        %1001 = vmatpush.bf16.msra.mxu0 0
        %1002 = vmatpush.bf16.msra.mxu0 0
        %1003 = vmatpush.bf16.msra.mxu0 0
        %1004 = vmatpush.bf16.msra.mxu0 0
        %1005 = vmatpush.bf16.msra.mxu0 0
        %1006 = vmatpush.bf16.msra.mxu0 0
        %1007 = vmatpush.bf16.msra.mxu0 %v995
        %1008 = vmatpush.bf16.msra.mxu0 %v994
        %1009 = vmatmul.bf16.gmra.mxu0 %v999
        %v1010 = vpop.f32.mrf.mxu0
        %v1011 = vadd.f32 %v969, %v1010
        %v1012 = vpop.f32.mrf.mxu0
        %v1013 = vadd.f32 %v969, %v1012
        %1014 = vdwg.mxu0
        %v1015 = vmul.f32 %v1011, 0.5
        %v1016 = vmul.f32 %v1013, 0.5
        %v1017 = vmul.f32 %v1011, 0.044715
        %v1018 = vmul.f32 %v1013, 0.044715
        %v1019 = vmul.f32 %v1017, %v1011
        %v1020 = vmul.f32 %v1018, %v1013
        %v1021 = vmul.f32 %v1019, %v1011
        %v1022 = vmul.f32 %v1020, %v1013
        %v1023 = vadd.f32 %v1011, %v1021
        %v1024 = vadd.f32 %v1013, %v1022
        %v1025 = vmul.f32 %v1023, 0.7978846
        %v1026 = vmul.f32 %v1024, 0.7978846
        %v1027 = vtanh.pop %v1025
        %v1028 = vtanh.pop %v1026
        %v1029 = vadd.f32 %v1027, 1.0
        %v1030 = vadd.f32 %v1028, 1.0
        %v1031 = vmul.f32 %v1015, %v1029
        %v1032 = vmul.f32 %v1016, %v1030
        %1035 = vrot.lane.b32.xlu0 %v1011, 96
        %v1036 = vpop.permute.xlu0 %1035
        %1037 = vrot.lane.b32.xlu0 %v1013, 96
        %v1038 = vpop.permute.xlu0 %1037
        %v1041 = vmul.f32 %v1031, %v1036
        %v1042 = vmul.f32 %v1032, %v1038
        %v1043 = vpack.c.bf16 %v1042, %v1041
        %v1044 = vld [vmem:[%s394 + $0x8] sm:$0xff]
        %v1045 = vld [vmem:[%s394 + $0x10] sm:$0xf]
        %v1046 = vld [vmem:[%s394 + $0x1c] sm:$0xff]
        %v1047 = vld [vmem:[%s394 + $0x24] sm:$0xf]
        %v1048 = vld [vmem:[%s394 + $0x30] sm:$0xff]
        %v1049 = vld [vmem:[%s394 + $0x38] sm:$0xf]
        %v1050 = vld [vmem:[%s394 + $0x44] sm:$0xff]
        %v1051 = vld [vmem:[%s394 + $0x4c] sm:$0xf]
        %v1060 = vunpack.c.l.b16 %v1044
        %v1061 = vunpack.c.h.b16 %v1044
        %v1062 = vunpack.c.l.b16 %v1045
        %v1063 = vunpack.c.l.b16 %v1046
        %v1064 = vunpack.c.h.b16 %v1046
        %v1065 = vunpack.c.l.b16 %v1047
        %v1066 = vunpack.c.l.b16 %v1048
        %v1067 = vunpack.c.h.b16 %v1048
        %v1068 = vunpack.c.l.b16 %v1049
        %v1069 = vunpack.c.l.b16 %v1050
        %v1070 = vunpack.c.h.b16 %v1050
        %v1071 = vunpack.c.l.b16 %v1051
        %v1072 = vpack.c.b16 %v1063, %v1060
        %v1073 = vpack.c.b16 %v1064, %v1061
        %v1074 = vpack.c.b16 %v1065, %v1062
        %v1075 = vpack.c.b16 %v1069, %v1066
        %v1076 = vpack.c.b16 %v1070, %v1067
        %v1077 = vpack.c.b16 %v1071, %v1068
        %1078 = vrot.lane.b32.xlu0 %v1072, 96
        %v1079 = vpop.permute.xlu0 %1078
        %1080 = vrot.lane.b32.xlu0 %v1073, 96
        %v1081 = vpop.permute.xlu0 %1080
        %1082 = vrot.lane.b32.xlu0 %v1074, 96
        %v1083 = vpop.permute.xlu0 %1082
        %1084 = vrot.lane.b32.xlu0 %v1075, 96
        %v1085 = vpop.permute.xlu0 %1084
        %1086 = vrot.lane.b32.xlu0 %v1076, 96
        %v1087 = vpop.permute.xlu0 %1086
        %1088 = vrot.lane.b32.xlu0 %v1077, 96
        %v1089 = vpop.permute.xlu0 %1088
        %vm1090 = vcmask 785408
        %v1091 = vsel %vm1090, %v1079, %v1081
        %v1092 = vsel %vm1090, %v1081, %v1083
        %v1093 = vsel %vm1090, %v1085, %v1087
        %v1094 = vsel %vm1090, %v1087, %v1089
        %v1100 = vsel %vm484, %v1043, 0
        %1102 = vmatpush.bf16.msra.mxu0 0
        %1103 = vmatpush.bf16.msra.mxu0 0
        %1104 = vmatpush.bf16.msra.mxu0 0
        %1105 = vmatpush.bf16.msra.mxu0 0
        %1106 = vmatpush.bf16.msra.mxu0 0
        %1107 = vmatpush.bf16.msra.mxu0 0
        %1108 = vmatpush.bf16.msra.mxu0 %v1093
        %1109 = vmatpush.bf16.msra.mxu0 %v1091
        %1110 = vmatmul.bf16.gmra.mxu0 %v1100
        %v1111 = vpop.f32.mrf.mxu0
        %v1112 = vadd.f32 0.0, %v1111
        %v1113 = vpop.f32.mrf.mxu0
        %v1114 = vadd.f32 0.0, %v1113
        %1115 = vdwg.mxu0
        %1116 = vmatpush.bf16.msra.mxu0 0
        %1117 = vmatpush.bf16.msra.mxu0 0
        %1118 = vmatpush.bf16.msra.mxu0 0
        %1119 = vmatpush.bf16.msra.mxu0 0
        %1120 = vmatpush.bf16.msra.mxu0 0
        %1121 = vmatpush.bf16.msra.mxu0 0
        %1122 = vmatpush.bf16.msra.mxu0 %v1094
        %1123 = vmatpush.bf16.msra.mxu0 %v1092
        %1124 = vmatmul.bf16.gmra.mxu0 %v1100
        %v1125 = vpop.f32.mrf.mxu0
        %v1126 = vadd.f32 0.0, %v1125
        %v1127 = vpop.f32.mrf.mxu0
        %v1128 = vadd.f32 0.0, %v1127
        %1129 = vdwg.mxu0
        %v1130 = vpack.c.bf16 %v907, %v892
        %v1131 = vld [vmem:[%s404] sm:$0xf]
        %v1132 = vld [vmem:[%s404 + $0x4] sm:$0xf]
        %v1133 = vld [vmem:[%s404 + $0x8] sm:$0xf]
        %v1134 = vld [vmem:[%s404 + $0xc] sm:$0xf]
        %v1135 = vld [vmem:[%s404 + $0x10] sm:$0xf]
        %v1136 = vld [vmem:[%s404 + $0x14] sm:$0xf]
        %v1137 = vld [vmem:[%s404 + $0x18] sm:$0xf]
        %v1138 = vld [vmem:[%s404 + $0x1c] sm:$0xf]
        %v1139 = vld [vmem:[%s404 + $0x20] sm:$0xf]
        %v1140 = vld [vmem:[%s404 + $0x24] sm:$0xf]
        %v1141 = vld [vmem:[%s404 + $0x28] sm:$0xf]
        %v1142 = vld [vmem:[%s404 + $0x2c] sm:$0xf]
        %v1143 = vld [vmem:[%s404 + $0x30] sm:$0xf]
        %v1144 = vld [vmem:[%s404 + $0x34] sm:$0xf]
        %v1145 = vld [vmem:[%s404 + $0x38] sm:$0xf]
        %v1146 = vld [vmem:[%s404 + $0x3c] sm:$0xf]
        %v1163 = vunpack.c.l.b16 %v1131
        %v1164 = vunpack.c.l.b16 %v1132
        %v1165 = vunpack.c.l.b16 %v1133
        %v1166 = vunpack.c.l.b16 %v1134
        %v1167 = vunpack.c.l.b16 %v1135
        %v1168 = vunpack.c.l.b16 %v1136
        %v1169 = vunpack.c.l.b16 %v1137
        %v1170 = vunpack.c.l.b16 %v1138
        %v1171 = vunpack.c.l.b16 %v1139
        %v1172 = vunpack.c.l.b16 %v1140
        %v1173 = vunpack.c.l.b16 %v1141
        %v1174 = vunpack.c.l.b16 %v1142
        %v1175 = vunpack.c.l.b16 %v1143
        %v1176 = vunpack.c.l.b16 %v1144
        %v1177 = vunpack.c.l.b16 %v1145
        %v1178 = vunpack.c.l.b16 %v1146
        %v1179 = vpack.c.b16 %v1164, %v1163
        %v1180 = vpack.c.b16 %v1166, %v1165
        %v1181 = vpack.c.b16 %v1168, %v1167
        %v1182 = vpack.c.b16 %v1170, %v1169
        %v1183 = vpack.c.b16 %v1172, %v1171
        %v1184 = vpack.c.b16 %v1174, %v1173
        %v1185 = vpack.c.b16 %v1176, %v1175
        %v1186 = vpack.c.b16 %v1178, %v1177
        %1195 = vmatpush.bf16.msra.mxu0 %v1186
        %1196 = vmatpush.bf16.msra.mxu0 %v1185
        %1197 = vmatpush.bf16.msra.mxu0 %v1184
        %1198 = vmatpush.bf16.msra.mxu0 %v1183
        %1199 = vmatpush.bf16.msra.mxu0 %v1182
        %1200 = vmatpush.bf16.msra.mxu0 %v1181
        %1201 = vmatpush.bf16.msra.mxu0 %v1180
        %1202 = vmatpush.bf16.msra.mxu0 %v1179
        %1203 = vmatmul.bf16.gmra.mxu0 %v1130
        %v1204 = vpop.f32.mrf.mxu0
        %v1205 = vadd.f32 0.0, %v1204
        %v1206 = vpop.f32.mrf.mxu0
        %v1207 = vadd.f32 0.0, %v1206
        %1208 = vdwg.mxu0
        %1210 = vset.pattern.permute.xlu0 0
        %1211 = vperm.xlu0 %1210, %v892
        %v1212 = vpop.permute.xlu0 %1211
        %1215 = vset.pattern.permute.xlu0 0
        %1216 = vperm.xlu0 %1215, %v907
        %v1217 = vpop.permute.xlu0 %1216
        %v1219 = vmul.f32 %v1212, %v1112
        %v1220 = vmul.f32 %v1217, %v1114
        %v1221 = vadd.f32 %v1205, %v1219
        %v1222 = vadd.f32 %v1207, %v1220
        %v1223 = vmul.f32 %v1212, %v1126
        %v1224 = vmul.f32 %v1217, %v1128
        %1227 = vrot.lane.b32.xlu0 %v1223, 32
        %v1228 = vpop.permute.xlu0 %1227
        %1229 = vrot.lane.b32.xlu0 %v1224, 32
        %v1230 = vpop.permute.xlu0 %1229
        %v1233 = vadd.f32 %v1205, %v1228
        %v1234 = vadd.f32 %v1207, %v1230
        %1235 = vset.pattern.permute.xlu0 1
        %1236 = vperm.xlu0 %1235, %v892
        %v1237 = vpop.permute.xlu0 %1236
        %1239 = vset.pattern.permute.xlu0 1
        %1240 = vperm.xlu0 %1239, %v907
        %v1241 = vpop.permute.xlu0 %1240
        %v1243 = vmul.f32 %v1237, %v1112
        %v1244 = vmul.f32 %v1241, %v1114
        %1247 = vrot.lane.b32.xlu0 %v1243, 96
        %v1248 = vpop.permute.xlu0 %1247
        %1249 = vrot.lane.b32.xlu0 %v1244, 96
        %v1250 = vpop.permute.xlu0 %1249
        %v1253 = vadd.f32 %v1221, %v1248
        %v1254 = vadd.f32 %v1222, %v1250
        %v1255 = vmul.f32 %v1237, %v1126
        %v1256 = vmul.f32 %v1241, %v1128
        %v1257 = vadd.f32 %v1233, %v1255
        %v1258 = vadd.f32 %v1234, %v1256
        %1259 = vset.pattern.permute.xlu0 2
        %1260 = vperm.xlu0 %1259, %v892
        %v1261 = vpop.permute.xlu0 %1260
        %1263 = vset.pattern.permute.xlu0 2
        %1264 = vperm.xlu0 %1263, %v907
        %v1265 = vpop.permute.xlu0 %1264
        %v1267 = vmul.f32 %v1261, %v1112
        %v1268 = vmul.f32 %v1265, %v1114
        %1271 = vrot.lane.b32.xlu0 %v1267, 64
        %v1272 = vpop.permute.xlu0 %1271
        %1273 = vrot.lane.b32.xlu0 %v1268, 64
        %v1274 = vpop.permute.xlu0 %1273
        %v1277 = vadd.f32 %v1253, %v1272
        %v1278 = vadd.f32 %v1254, %v1274
        %v1279 = vmul.f32 %v1261, %v1126
        %v1280 = vmul.f32 %v1265, %v1128
        %1283 = vrot.lane.b32.xlu0 %v1279, 96
        %v1284 = vpop.permute.xlu0 %1283
        %1285 = vrot.lane.b32.xlu0 %v1280, 96
        %v1286 = vpop.permute.xlu0 %1285
        %v1289 = vadd.f32 %v1257, %v1284
        %v1290 = vadd.f32 %v1258, %v1286
        %1291 = vset.pattern.permute.xlu0 3
        %1292 = vperm.xlu0 %1291, %v892
        %v1293 = vpop.permute.xlu0 %1292
        %1295 = vset.pattern.permute.xlu0 3
        %1296 = vperm.xlu0 %1295, %v907
        %v1297 = vpop.permute.xlu0 %1296
        %v1299 = vmul.f32 %v1293, %v1112
        %v1300 = vmul.f32 %v1297, %v1114
        %1303 = vrot.lane.b32.xlu0 %v1299, 32
        %v1304 = vpop.permute.xlu0 %1303
        %1305 = vrot.lane.b32.xlu0 %v1300, 32
        %v1306 = vpop.permute.xlu0 %1305
        %v1309 = vadd.f32 %v1277, %v1304
        %v1310 = vadd.f32 %v1278, %v1306
        %v1311 = vmul.f32 %v1293, %v1126
        %v1312 = vmul.f32 %v1297, %v1128
        %1315 = vrot.lane.b32.xlu0 %v1311, 64
        %v1316 = vpop.permute.xlu0 %1315
        %1317 = vrot.lane.b32.xlu0 %v1312, 64
        %v1318 = vpop.permute.xlu0 %1317
        %v1321 = vadd.f32 %v1289, %v1316
        %v1322 = vadd.f32 %v1290, %v1318
        %v1323 = vmul.f32 %v1309, %v1041
        %v1324 = vmul.f32 %v1310, %v1042
        %1327 = vrot.lane.b32.xlu0 %v1321, 96
        %v1328 = vpop.permute.xlu0 %1327
        %1329 = vrot.lane.b32.xlu0 %v1322, 96
        %v1330 = vpop.permute.xlu0 %1329
        %v1333 = vadd.f32 %v1323, %v1328
        %v1334 = vadd.f32 %v1324, %v1330
        %v1335 = vpack.c.bf16 %v1334, %v1333
        %v1336 = vld [vmem:[%s409 + $0x7] sm:$0x1]
        %v1337 = vperm.slane %v1336, 0
        %v1341 = vsel %vm484, %v1335, 0
        %1343 = vmatpush.bf16.msra.mxu0 0
        %1344 = vmatpush.bf16.msra.mxu0 0
        %1345 = vmatpush.bf16.msra.mxu0 0
        %1346 = vmatpush.bf16.msra.mxu0 0
        %1347 = vmatpush.bf16.msra.mxu0 0
        %1348 = vmatpush.bf16.msra.mxu0 0
        %1349 = vmatpush.bf16.msra.mxu0 %v1089
        %1350 = vmatpush.bf16.msra.mxu0 %v1083
        %1351 = vmatmul.bf16.gmra.mxu0 %v1341
        %v1352 = vpop.f32.mrf.mxu0
        %v1353 = vadd.f32 %v1337, %v1352
        %v1354 = vpop.f32.mrf.mxu0
        %v1355 = vadd.f32 %v1337, %v1354
        %1356 = vdwg.mxu0
        %v1357 = vmul.f32 %v1353, 0.5
        %v1358 = vmul.f32 %v1355, 0.5
        %v1359 = vmul.f32 %v1353, 0.044715
        %v1360 = vmul.f32 %v1355, 0.044715
        %v1361 = vmul.f32 %v1359, %v1353
        %v1362 = vmul.f32 %v1360, %v1355
        %v1363 = vmul.f32 %v1361, %v1353
        %v1364 = vmul.f32 %v1362, %v1355
        %v1365 = vadd.f32 %v1353, %v1363
        %v1366 = vadd.f32 %v1355, %v1364
        %v1367 = vmul.f32 %v1365, 0.7978846
        %v1368 = vmul.f32 %v1366, 0.7978846
        %v1369 = vtanh.pop %v1367
        %v1370 = vtanh.pop %v1368
        %v1371 = vadd.f32 %v1369, 1.0
        %v1372 = vadd.f32 %v1370, 1.0
        %v1373 = vmul.f32 %v1357, %v1371
        %v1374 = vmul.f32 %v1358, %v1372
        %v1375 = vpack.c.bf16 %v1374, %v1373
        %v1376 = vld [vmem:[%s399 + $0x10] sm:$0xf]
        %v1377 = vld [vmem:[%s399 + $0x14] sm:$0xf]
        %v1378 = vld [vmem:[%s399 + $0x18] sm:$0xf]
        %v1379 = vld [vmem:[%s399 + $0x1c] sm:$0xf]
        %v1380 = vld [vmem:[%s399 + $0x20] sm:$0xf]
        %v1381 = vld [vmem:[%s399 + $0x24] sm:$0xf]
        %v1382 = vld [vmem:[%s399 + $0x28] sm:$0xf]
        %v1383 = vld [vmem:[%s399 + $0x2c] sm:$0xf]
        %v1384 = vld [vmem:[%s409 + $0x8] sm:$0x1]
        %v1385 = vperm.slane %v1384, 0
        %v1394 = vunpack.c.l.b16 %v1376
        %v1395 = vunpack.c.l.b16 %v1377
        %v1396 = vunpack.c.l.b16 %v1378
        %v1397 = vunpack.c.l.b16 %v1379
        %v1398 = vunpack.c.l.b16 %v1380
        %v1399 = vunpack.c.l.b16 %v1381
        %v1400 = vunpack.c.l.b16 %v1382
        %v1401 = vunpack.c.l.b16 %v1383
        %v1402 = vpack.c.b16 %v1395, %v1394
        %v1403 = vpack.c.b16 %v1397, %v1396
        %v1404 = vpack.c.b16 %v1399, %v1398
        %v1405 = vpack.c.b16 %v1401, %v1400
        %vm1410 = vcmask 523264
        %v1412 = vsel %vm1410, %v1375, 0
        %1414 = vmatpush.bf16.msra.mxu0 0
        %1415 = vmatpush.bf16.msra.mxu0 0
        %1416 = vmatpush.bf16.msra.mxu0 0
        %1417 = vmatpush.bf16.msra.mxu0 0
        %1418 = vmatpush.bf16.msra.mxu0 %v1405
        %1419 = vmatpush.bf16.msra.mxu0 %v1404
        %1420 = vmatpush.bf16.msra.mxu0 %v1403
        %1421 = vmatpush.bf16.msra.mxu0 %v1402
        %1422 = vmatmul.bf16.gmra.mxu0 %v1412
        %v1423 = vpop.f32.mrf.mxu0
        %v1424 = vadd.f32 %v1385, %v1423
        %v1425 = vpop.f32.mrf.mxu0
        %v1426 = vadd.f32 %v1385, %v1425
        %1427 = vdwg.mxu0
        %v1428 = vadd.f32 %v793, %v1424
        %v1429 = vadd.f32 %v794, %v1426
        %1430 = vst.msk [vmem:[%s373] sm:$0xff] %vm484, %v1428
        %1431 = vst.msk [vmem:[%s373 + $0x8] sm:$0xff] %vm484, %v1429
        %s1432 = sand.u32 %s215, 1
        %s1433 = scalar_lea.sflag [#allocation3], %s1432
        %s1434 = sand.u32 %s215, 1
        %s1435 = smul.addr %s1434, 16
        %s1436 = scalar_lea.vmem [#allocation2], %s1435
        %p1437 = scmp.lt.s32.totalorder %s28, 1
        %s1438 = scalar_select %p1437, %s28, 1
        %p1439 = scmp.lt.s32.totalorder %s27, 1
        %s1440 = scalar_select %p1439, %s27, 1
        %s1441 = smul.addr %s1440, 2
        %s1442 = smul.addr %s1438, 4
        %s1443 = sadd.s32 %s1441, %s1442
        %s1444 = smul.addr %s1443, 8
        %s1445 = scalar_lea.vmem %s8, %s1444
        // Predicated region
        $region53: #{tpu_custom_call.1} parent=47 // pred_check
          %p1446 = pneg %p225
        $region54: #{tpu_custom_call.1} parent=47 // pred_check_branch
          %1448 = sbr.rel (%p1446) target = $region56
        $region55: #{tpu_custom_call.1} parent=47 // pred_region
          %1450 = vsyncadd %s1433, 0
          %s1451 = smul.addr %s27, 2
          %s1452 = smul.addr %s1451, 8
          %s1453 = scalar_lea.hbm %s7, %s1452
          %s1454 = sshll.u32 %s1436, 4
          %s1455 = int_to_ptr.vmem [resolvable:$true] %s1454
          %s1456 = sshll.u32 %s1453, 4
          %s1457 = int_to_ptr.hbm [resolvable:$true] %s1456
          %1462 = dma.vmem_to_hbm [thread:$0]  %s1455, 256, %s1457, %s1433, 128, 128, 8
        $region56: #{tpu_custom_call.1} parent=47 // pred_fallthru
          _
        // Predicated region
        $region57: #{tpu_custom_call.1} parent=47 // pred_check
          %p1463 = pneg %p253
        $region58: #{tpu_custom_call.1} parent=47 // pred_check_branch
          %1465 = sbr.rel (%p1463) target = $region60
        $region59: #{tpu_custom_call.1} parent=47 // pred_region
          _
        $region60: #{tpu_custom_call.1} parent=47 // pred_fallthru
          _
      $region48: #{tpu_custom_call.1} parent=5 // pred_fallthru
        _
      %p1466 = scmp.le.s32.totalorder 2, %s18
      // Predicated region
      $region61: #{tpu_custom_call.1} parent=5 // pred_check
        %p1467 = pneg %p1466
      $region62: #{tpu_custom_call.1} parent=5 // pred_check_branch
        %1469 = sbr.rel (%p1467) target = $region64
      $region63: #{tpu_custom_call.1} parent=5 // pred_region
        %s1470 = ssub.s32 %s18, 2
        // Predicated region
        $region65: #{tpu_custom_call.1} parent=63 // pred_check
          %p1471 = pneg %p231
        $region66: #{tpu_custom_call.1} parent=63 // pred_check_branch
          %1473 = sbr.rel (%p1471) target = $region68
        $region67: #{tpu_custom_call.1} parent=63 // pred_region
          %s1474 = sand.u32 %s216, 1
          %s1475 = scalar_lea.sflag [#allocation3], %s1474
          %s1476 = sand.u32 %s216, 1
          %s1477 = smul.addr %s1476, 16
          %s1478 = scalar_lea.vmem [#allocation2], %s1477
          %1480 = dma.done %s1475, 256
        $region68: #{tpu_custom_call.1} parent=63 // pred_fallthru
          _
        // Predicated region
        $region69: #{tpu_custom_call.1} parent=63 // pred_check
          %p1481 = pneg %p259
        $region70: #{tpu_custom_call.1} parent=63 // pred_check_branch
          %1483 = sbr.rel (%p1481) target = $region72
        $region71: #{tpu_custom_call.1} parent=63 // pred_region
          %p1484 = scmp.lt.s32.totalorder %s30, 1
          %s1485 = scalar_select %p1484, %s30, 1
          %p1486 = scmp.lt.s32.totalorder %s29, 1
          %s1487 = scalar_select %p1486, %s29, 1
          %s1488 = smul.addr %s1487, 2
          %s1489 = smul.addr %s1485, 4
          %s1490 = sadd.s32 %s1488, %s1489
          %s1491 = smul.addr %s1490, 8
          %s1492 = scalar_lea.vmem %s8, %s1491
        $region72: #{tpu_custom_call.1} parent=63 // pred_fallthru
          _
      $region64: #{tpu_custom_call.1} parent=5 // pred_fallthru
        _
    $region6: #{tpu_custom_call.1} parent=1 // loop_footer
      %s22 = sadd.s32 1, %s18
    $region7: #{tpu_custom_call.1} parent=1 // loop_footer_branch
      %17 = sbr.rel target = $region3
    $region8: #{tpu_custom_call.1} parent=1 // loop_exit
      _
    %1493 = vsyncpa [#allocation3], 1
    %s1494 = scalar_lea.sflag [#allocation3], 1
    %1495 = vsyncpa %s1494, 1

</llo_original>
